<compile_context>
chip_gen: v5e
topology: v5e:2x2
jax: 0.10.0
libtpu: 0.0.40
codegen_flags: <defaults>
</compile_context>

<pallas_src>
import functools

import jax
import jax.numpy as jnp
from jax import lax
from jax.experimental import pallas as pl
from jax.experimental.pallas import tpu as pltpu


def _avg_pool_kernel(x_ref, o_ref, *, s):
    """x_ref: (1, C_blk, H, W)  ->  o_ref: (1, C_blk, H//s, W//s)."""
    x = x_ref[...].astype(jnp.float32)
    _, c_blk, h, w = x.shape
    h_out, w_out = h // s, w // s
    # pool along H (sublane axis): split rows into (h_out, s) windows and sum
    xh = jnp.sum(x.reshape(1, c_blk, h_out, s, w), axis=3)          # (1, C_blk, H_out, W)
    # pool along W (lane axis): split cols into (w_out, s) windows and sum
    xw = jnp.sum(xh.reshape(1, c_blk, h_out, w_out, s), axis=4)     # (1, C_blk, H_out, W_out)
    o_ref[...] = (xw * (1.0 / (s * s))).astype(o_ref.dtype)


def avg_pool2d(x, scale_factor=2, *, max_block_bytes=4 * 1024 * 1024):
    """Pallas TPU implementation of AveragePoolingLayer.forward.  x is NCHW."""
    s = int(scale_factor)
    n, c, h, w = x.shape
    h_out, w_out = h // s, w // s
    # PyTorch avg_pool2d with padding=0 floors the output size: drop trailing rows/cols.
    if (h_out * s, w_out * s) != (h, w):
        x = x[:, :, : h_out * s, : w_out * s]
        h, w = h_out * s, w_out * s
    if s == 1:
        return x

    # channel block: largest divisor of C whose input block stays under the VMEM budget
    bytes_per_chan = h * w * x.dtype.itemsize
    c_blk = c
    while c_blk > 1 and c_blk * bytes_per_chan > max_block_bytes:
        c_blk -= 1
        while c % c_blk:
            c_blk -= 1

    kernel = functools.partial(_avg_pool_kernel, s=s)
    out = pl.pallas_call(
        kernel,
        out_shape=jax.ShapeDtypeStruct((n, c, h_out, w_out), x.dtype),
        grid=(n, c // c_blk),
        in_specs=[pl.BlockSpec((1, c_blk, h, w), lambda i, j: (i, j, 0, 0))],
        out_specs=pl.BlockSpec((1, c_blk, h_out, w_out), lambda i, j: (i, j, 0, 0)),
        compiler_params=pltpu.CompilerParams(
            dimension_semantics=("parallel", "parallel"),
        ),
    )(x)
    return out


def avg_pool2d_reference(x, scale_factor=2):
    """Pure-JAX transcription of F.avg_pool2d(k=s, stride=s, padding=0)."""
    s = int(scale_factor)
    if s == 1:
        return x
    summed = lax.reduce_window(
        x, jnp.array(0, x.dtype), lax.add,
        window_dimensions=(1, 1, s, s),
        window_strides=(1, 1, s, s),
        padding="VALID",
    )
    return (summed / (s * s)).astype(x.dtype)


if __name__ == "__main__":
    key = jax.random.PRNGKey(0)
    # small shapes consistent with the module: batch=2, channels=4, spatial=16x16
    x = jax.random.normal(key, (2, 4, 16, 16), dtype=jnp.float32)
    scale_factor = 2

    out = avg_pool2d(x, scale_factor=scale_factor)
    out = jax.block_until_ready(out)

    ref = avg_pool2d_reference(x, scale_factor=scale_factor)
    assert out.shape == (2, 4, 8, 8), out.shape
    assert jnp.allclose(out, ref, atol=1e-5, rtol=1e-5), "mismatch vs reference"

    print("KERNEL_OK")
</pallas_src>

<mosaic_0001>
module attributes {stable_mosaic.version = 11 : i64} {
  func.func @_avg_pool_kernel(%arg0: i32, %arg1: i32, %arg2: memref<1x4x16x16xf32, #tpu.memory_space<vmem>>, %arg3: memref<1x4x8x8xf32, #tpu.memory_space<vmem>>) attributes {dimension_semantics = [#tpu.dimension_semantics<parallel>, #tpu.dimension_semantics<parallel>], iteration_bounds = array<i64: 2, 1>, scalar_prefetch = 0 : i64, scratch_operands = 0 : i64, tpu.core_type = #tpu.core_type<tc>, window_params = [{transform_indices = @transform_0, window_bounds = array<i64: 1, 4, 16, 16>}, {transform_indices = @transform_1, window_bounds = array<i64: 1, 4, 8, 8>}]} {
    %c0 = arith.constant 0 : index
    %c0_0 = arith.constant 0 : index
    %c0_1 = arith.constant 0 : index
    %c0_2 = arith.constant 0 : index
    %0 = vector.load %arg2[%c0, %c0_0, %c0_1, %c0_2] : memref<1x4x16x16xf32, #tpu.memory_space<vmem>>, vector<1x4x16x16xf32>
    %1 = vector.shape_cast %0 : vector<1x4x16x16xf32> to vector<1x4x8x2x16xf32>
    %cst = arith.constant dense<0.000000e+00> : vector<1x4x8x16xf32>
    %2 = vector.multi_reduction <add>, %1, %cst [3] : vector<1x4x8x2x16xf32> to vector<1x4x8x16xf32>
    %3 = vector.shape_cast %2 : vector<1x4x8x16xf32> to vector<1x4x8x8x2xf32>
    %cst_3 = arith.constant dense<0.000000e+00> : vector<1x4x8x8xf32>
    %4 = vector.multi_reduction <add>, %3, %cst_3 [4] : vector<1x4x8x8x2xf32> to vector<1x4x8x8xf32>
    %cst_4 = arith.constant 2.500000e-01 : f32
    %5 = vector.broadcast %cst_4 : f32 to vector<1x4x8x8xf32>
    %6 = arith.mulf %4, %5 : vector<1x4x8x8xf32>
    %c0_5 = arith.constant 0 : index
    %c0_6 = arith.constant 0 : index
    %c0_7 = arith.constant 0 : index
    %c0_8 = arith.constant 0 : index
    %7 = vector.load %arg3[%c0_5, %c0_6, %c0_7, %c0_8] : memref<1x4x8x8xf32, #tpu.memory_space<vmem>>, vector<1x4x8x8xf32>
    tpu.vector_store %arg3[%c0_5, %c0_6, %c0_7, %c0_8], %6 {strides = array<i32>} : memref<1x4x8x8xf32, #tpu.memory_space<vmem>>, vector<1x4x8x8xf32>,
    return
  }
  func.func @transform_0(%arg0: i32, %arg1: i32) -> (i32, i32, i32, i32) {
    %c0_i32 = arith.constant 0 : i32
    %c0_i32_0 = arith.constant 0 : i32
    %c0_i32_1 = arith.constant 0 : i32
    return %arg0, %arg1, %c0_i32, %c0_i32_0 : i32, i32, i32, i32
  }
  func.func @transform_1(%arg0: i32, %arg1: i32) -> (i32, i32, i32, i32) {
    %c0_i32 = arith.constant 0 : i32
    %c0_i32_0 = arith.constant 0 : i32
    %c0_i32_1 = arith.constant 0 : i32
    return %arg0, %arg1, %c0_i32, %c0_i32_0 : i32, i32, i32, i32
  }
}

</mosaic_0001>

<llo_original>
// kernel: tpu_custom_call.1
$region0: #{tpu_custom_call.1}
  #allocation0 [shape = 'u32[]', space=smem, size = 0x4, offset = 0x4, fixed_abs, tag = 'smem constant byte address 0x4 - core index']
  #allocation1 [shape = 'u32[72,128]{1,0:T(1,128)}', space=vmem, size = 0x9000, scoped, tag = 'internal scratch']
  %s0 = inlined_call_operand.hbm [shape: f32[2,4,16,16], index: 0, kind: input, shape index: {}]
  %s1 = inlined_call_operand.hbm [shape: f32[2,4,8,8], index: 1, kind: output, shape index: {}]
  %s2 = sld [smem:[#allocation0]]
  $region41: #{tpu_custom_call.1} parent=0
    _
  %s4 = ssub.s32 1, %s2
  %s5 = scalar_select 0, %s4, %s2
  $region1: #{tpu_custom_call.1} parent=0
    #allocation2 [shape = 'u8[65536]{0}', space=vmem, size = 0x10000, scoped, tag = 'input window, operand 0']
    #allocation3 [shape = 's32[2]{0}', space=sflag, size = 0x8, scoped, tag = 'scoped memory for tpu_custom_call.1']
    #allocation4 [shape = 's32[2]{0}', space=sflag, size = 0x8, scoped, tag = 'scoped memory for tpu_custom_call.1']
    #allocation5 [shape = 'u8[32768]{0}', space=vmem, size = 0x8000, scoped, tag = 'output window, operand 0']
    %6 = vsyncpa [#allocation3], 0
    %s7 = scalar_lea.sflag [#allocation3], 1
    %8 = vsyncpa %s7, 0
    %9 = vsyncpa [#allocation4], 0
    %s10 = scalar_lea.sflag [#allocation4], 1
    %11 = vsyncpa %s10, 0
    loop: start=0, step=1, limit=4
    $region2: #{tpu_custom_call.1} parent=1 // loop_pre_header
      _
    $region3: #{tpu_custom_call.1} parent=1 // loop_header
      %s13 = sphi 0, %s17
      %p14 = scmp.ge.s32.totalorder %s13, 4
      %s20 = sphi 0, %s32
      %s21 = sphi 0, %s28
      %s22 = sphi 0, %s20
      %s23 = sphi 0, %s21
      %s24 = sphi 0, %s22
      %s25 = sphi 0, %s23
      %s37 = sphi 0, %s39
      %s40 = sphi 0, %s37
      %s41 = sphi 0, %s40
      %s57 = sphi 0, %s41
      %s65 = sphi 0, %s67
      %s68 = sphi 0, %s65
      %s69 = sphi 0, %s68
      %s85 = sphi 0, %s69
    $region4: #{tpu_custom_call.1} parent=1 // loop_header_branch
      %16 = sbr.rel (%p14) target = $region8
    $region5: #{tpu_custom_call.1} parent=1 // loop_body
      %s18 = ssub.s32 %s13, 1
      %s19 = ssub.s32 %s13, 2
      %s26 = sadd.s32 1, %s21
      %p27 = scmp.ge.s32.totalorder %s26, 1
      %s28 = scalar_select %p27, 0, %s26
      %s29 = sadd.s32 1, %s20
      %s30 = scalar_select %p27, %s29, %s20
      %p31 = scmp.ge.s32.totalorder %s30, 2
      %s32 = scalar_select %p31, 0, %s30
      %s33 = ssub.s32 %s20, %s32
      %s34 = ssub.s32 %s21, %s28
      %s35 = sor.u32 %s33, %s34
      %p36 = scmp.eq.s32.totalorder %s35, 0
      %s38 = sadd.s32 %s37, 1
      %s39 = scalar_select %p36, %s37, %s38
      %p42 = pneg %p36
      %p43 = scmp.eq.s32.totalorder %s13, 1
      %p44 = por %p42, %p43
      %p45 = scmp.ne.s32.totalorder %s37, %s40
      %p46 = scmp.eq.s32.totalorder %s13, 0
      %p47 = por %p45, %p46
      %p48 = scmp.ne.s32.totalorder %s37, %s40
      %p49 = scmp.eq.s32.totalorder %s18, 1
      %p50 = por %p48, %p49
      %p51 = scmp.ne.s32.totalorder %s40, %s41
      %p52 = scmp.eq.s32.totalorder %s18, 0
      %p53 = por %p51, %p52
      %p54 = scmp.ne.s32.totalorder %s40, %s41
      %p55 = scmp.eq.s32.totalorder %s19, 1
      %p56 = por %p54, %p55
      %p58 = scmp.ne.s32.totalorder %s41, %s57
      %p59 = scmp.eq.s32.totalorder %s19, 0
      %p60 = por %p58, %p59
      %s61 = ssub.s32 %s20, %s32
      %s62 = ssub.s32 %s21, %s28
      %s63 = sor.u32 %s61, %s62
      %p64 = scmp.eq.s32.totalorder %s63, 0
      %s66 = sadd.s32 %s65, 1
      %s67 = scalar_select %p64, %s65, %s66
      %p70 = pneg %p64
      %p71 = scmp.eq.s32.totalorder %s13, 1
      %p72 = por %p70, %p71
      %p73 = scmp.ne.s32.totalorder %s65, %s68
      %p74 = scmp.eq.s32.totalorder %s13, 0
      %p75 = por %p73, %p74
      %p76 = scmp.ne.s32.totalorder %s65, %s68
      %p77 = scmp.eq.s32.totalorder %s18, 1
      %p78 = por %p76, %p77
      %p79 = scmp.ne.s32.totalorder %s68, %s69
      %p80 = scmp.eq.s32.totalorder %s18, 0
      %p81 = por %p79, %p80
      %p82 = scmp.ne.s32.totalorder %s68, %s69
      %p83 = scmp.eq.s32.totalorder %s19, 1
      %p84 = por %p82, %p83
      %p86 = scmp.ne.s32.totalorder %s69, %s85
      %p87 = scmp.eq.s32.totalorder %s19, 0
      %p88 = por %p86, %p87
      %p89 = scmp.le.s32.totalorder 1, %s13
      %p90 = scmp.lt.s32.totalorder %s13, 3
      %p91 = pnand %p89, %p90
      %p92 = pneg %p91
      // Predicated region
      $region9: #{tpu_custom_call.1} parent=5 // pred_check
        _
      $region10: #{tpu_custom_call.1} parent=5 // pred_check_branch
        %94 = sbr.rel (%p91) target = $region12
      $region11: #{tpu_custom_call.1} parent=5 // pred_region
        %s95 = ssub.s32 %s13, 1
      $region12: #{tpu_custom_call.1} parent=5 // pred_fallthru
        _
      %p96 = scmp.lt.s32.totalorder %s13, 2
      // Predicated region
      $region13: #{tpu_custom_call.1} parent=5 // pred_check
        %p97 = pneg %p96
      $region14: #{tpu_custom_call.1} parent=5 // pred_check_branch
        %99 = sbr.rel (%p97) target = $region16
      $region15: #{tpu_custom_call.1} parent=5 // pred_region
        // Predicated region
        $region17: #{tpu_custom_call.1} parent=15 // pred_check
          %p100 = pneg %p47
        $region18: #{tpu_custom_call.1} parent=15 // pred_check_branch
          %102 = sbr.rel (%p100) target = $region20
        $region19: #{tpu_custom_call.1} parent=15 // pred_region
          %s103 = sand.u32 %s37, 1
          %s104 = scalar_lea.sflag [#allocation3], %s103
          %s105 = sand.u32 %s37, 1
          %s106 = smul.addr %s105, 64
          %s107 = scalar_lea.vmem [#allocation2], %s106
          %s108 = smul.u32 4, %s21
          %110 = vsyncadd %s104, 0
          %s111 = smul.addr %s108, 2
          %s112 = smul.addr %s20, 8
          %s113 = sadd.s32 %s111, %s112
          %s114 = smul.addr %s113, 8
          %s115 = scalar_lea.hbm %s0, %s114
          %s116 = sshll.u32 %s115, 4
          %s117 = int_to_ptr.hbm [resolvable:$true] %s116
          %s118 = sshll.u32 %s107, 4
          %s119 = int_to_ptr.vmem [resolvable:$true] %s118
          %124 = dma.hbm_to_vmem [thread:$0]  %s117, 1024, %s119, %s104, 128, 128, 8
        $region20: #{tpu_custom_call.1} parent=15 // pred_fallthru
          _
      $region16: #{tpu_custom_call.1} parent=5 // pred_fallthru
        _
      %p125 = scmp.le.s32.totalorder 1, %s13
      %p126 = scmp.lt.s32.totalorder %s13, 3
      %p127 = pnand %p125, %p126
      %p128 = pneg %p127
      // Predicated region
      $region21: #{tpu_custom_call.1} parent=5 // pred_check
        _
      $region22: #{tpu_custom_call.1} parent=5 // pred_check_branch
        %130 = sbr.rel (%p127) target = $region24
      $region23: #{tpu_custom_call.1} parent=5 // pred_region
        %s131 = ssub.s32 %s13, 1
        %s132 = sand.u32 %s40, 1
        %s133 = scalar_lea.sflag [#allocation3], %s132
        %s134 = sand.u32 %s40, 1
        %s135 = smul.addr %s134, 64
        %s136 = scalar_lea.vmem [#allocation2], %s135
        // Predicated region
        $region25: #{tpu_custom_call.1} parent=23 // pred_check
          %p137 = pneg %p53
        $region26: #{tpu_custom_call.1} parent=23 // pred_check_branch
          %139 = sbr.rel (%p137) target = $region28
        $region27: #{tpu_custom_call.1} parent=23 // pred_region
          %141 = dma.done %s133, 1024
        $region28: #{tpu_custom_call.1} parent=23 // pred_fallthru
          _
        %s142 = sand.u32 %s40, 1
        %s143 = scalar_lea.sflag [#allocation3], %s142
        %s144 = sand.u32 %s40, 1
        %s145 = smul.addr %s144, 64
        %s146 = scalar_lea.vmem [#allocation2], %s145
        %p147 = pneg %p53
        %p148 = pneg %p50
        %p149 = pneg %p81
        %p150 = pneg %p78
        %s151 = sand.u32 %s68, 1
        %s152 = scalar_lea.sflag [#allocation4], %s151
        %s153 = sand.u32 %s68, 1
        %s154 = smul.addr %s153, 32
        %s155 = scalar_lea.vmem [#allocation5], %s154
        %s156 = smul.u32 4, %s23
        %s157 = smul.u32 4, %s23
        %v158 = vld [vmem:[%s136] sm:$0xff]
        %v159 = vld [vmem:[%s136 + $0x8] sm:$0xff]
        %v160 = vld [vmem:[%s136 + $0x10] sm:$0xff]
        %v161 = vld [vmem:[%s136 + $0x18] sm:$0xff]
        %v162 = vld [vmem:[%s136 + $0x20] sm:$0xff]
        %v163 = vld [vmem:[%s136 + $0x28] sm:$0xff]
        %v164 = vld [vmem:[%s136 + $0x30] sm:$0xff]
        %v165 = vld [vmem:[%s136 + $0x38] sm:$0xff]
        %v174 = vrot.slane %v158, 2
        %v175 = vrot.slane %v158, 4
        %v176 = vrot.slane %v158, 6
        %v177 = vrot.slane %v159, 2
        %v178 = vrot.slane %v159, 4
        %v179 = vrot.slane %v159, 6
        %v180 = vrot.slane %v160, 2
        %v181 = vrot.slane %v160, 4
        %v182 = vrot.slane %v160, 6
        %v183 = vrot.slane %v161, 2
        %v184 = vrot.slane %v161, 4
        %v185 = vrot.slane %v161, 6
        %v186 = vrot.slane %v162, 2
        %v187 = vrot.slane %v162, 4
        %v188 = vrot.slane %v162, 6
        %v189 = vrot.slane %v163, 2
        %v190 = vrot.slane %v163, 4
        %v191 = vrot.slane %v163, 6
        %v192 = vrot.slane %v164, 2
        %v193 = vrot.slane %v164, 4
        %v194 = vrot.slane %v164, 6
        %v195 = vrot.slane %v165, 2
        %v196 = vrot.slane %v165, 4
        %v197 = vrot.slane %v165, 6
        %vm222 = vcmask 123904
        %v223 = vsel %vm222, %v158, 0.0
        %v224 = vrot.slane %v223, 4
        %v225 = vadd.f32 %v223, %v224
        %v226 = vrot.slane %v225, 2
        %v227 = vadd.f32 %v225, %v226
        %v228 = vrot.slane %v227, 1
        %v229 = vadd.f32 %v227, %v228
        %v230 = vsel %vm222, %v174, 0.0
        %v231 = vrot.slane %v230, 4
        %v232 = vadd.f32 %v230, %v231
        %v233 = vrot.slane %v232, 2
        %v234 = vadd.f32 %v232, %v233
        %v235 = vrot.slane %v234, 1
        %v236 = vadd.f32 %v234, %v235
        %v237 = vsel %vm222, %v175, 0.0
        %v238 = vrot.slane %v237, 4
        %v239 = vadd.f32 %v237, %v238
        %v240 = vrot.slane %v239, 2
        %v241 = vadd.f32 %v239, %v240
        %v242 = vrot.slane %v241, 1
        %v243 = vadd.f32 %v241, %v242
        %v244 = vsel %vm222, %v176, 0.0
        %v245 = vrot.slane %v244, 4
        %v246 = vadd.f32 %v244, %v245
        %v247 = vrot.slane %v246, 2
        %v248 = vadd.f32 %v246, %v247
        %v249 = vrot.slane %v248, 1
        %v250 = vadd.f32 %v248, %v249
        %v251 = vsel %vm222, %v159, 0.0
        %v252 = vrot.slane %v251, 4
        %v253 = vadd.f32 %v251, %v252
        %v254 = vrot.slane %v253, 2
        %v255 = vadd.f32 %v253, %v254
        %v256 = vrot.slane %v255, 1
        %v257 = vadd.f32 %v255, %v256
        %v258 = vsel %vm222, %v177, 0.0
        %v259 = vrot.slane %v258, 4
        %v260 = vadd.f32 %v258, %v259
        %v261 = vrot.slane %v260, 2
        %v262 = vadd.f32 %v260, %v261
        %v263 = vrot.slane %v262, 1
        %v264 = vadd.f32 %v262, %v263
        %v265 = vsel %vm222, %v178, 0.0
        %v266 = vrot.slane %v265, 4
        %v267 = vadd.f32 %v265, %v266
        %v268 = vrot.slane %v267, 2
        %v269 = vadd.f32 %v267, %v268
        %v270 = vrot.slane %v269, 1
        %v271 = vadd.f32 %v269, %v270
        %v272 = vsel %vm222, %v179, 0.0
        %v273 = vrot.slane %v272, 4
        %v274 = vadd.f32 %v272, %v273
        %v275 = vrot.slane %v274, 2
        %v276 = vadd.f32 %v274, %v275
        %v277 = vrot.slane %v276, 1
        %v278 = vadd.f32 %v276, %v277
        %v279 = vsel %vm222, %v160, 0.0
        %v280 = vrot.slane %v279, 4
        %v281 = vadd.f32 %v279, %v280
        %v282 = vrot.slane %v281, 2
        %v283 = vadd.f32 %v281, %v282
        %v284 = vrot.slane %v283, 1
        %v285 = vadd.f32 %v283, %v284
        %v286 = vsel %vm222, %v180, 0.0
        %v287 = vrot.slane %v286, 4
        %v288 = vadd.f32 %v286, %v287
        %v289 = vrot.slane %v288, 2
        %v290 = vadd.f32 %v288, %v289
        %v291 = vrot.slane %v290, 1
        %v292 = vadd.f32 %v290, %v291
        %v293 = vsel %vm222, %v181, 0.0
        %v294 = vrot.slane %v293, 4
        %v295 = vadd.f32 %v293, %v294
        %v296 = vrot.slane %v295, 2
        %v297 = vadd.f32 %v295, %v296
        %v298 = vrot.slane %v297, 1
        %v299 = vadd.f32 %v297, %v298
        %v300 = vsel %vm222, %v182, 0.0
        %v301 = vrot.slane %v300, 4
        %v302 = vadd.f32 %v300, %v301
        %v303 = vrot.slane %v302, 2
        %v304 = vadd.f32 %v302, %v303
        %v305 = vrot.slane %v304, 1
        %v306 = vadd.f32 %v304, %v305
        %v307 = vsel %vm222, %v161, 0.0
        %v308 = vrot.slane %v307, 4
        %v309 = vadd.f32 %v307, %v308
        %v310 = vrot.slane %v309, 2
        %v311 = vadd.f32 %v309, %v310
        %v312 = vrot.slane %v311, 1
        %v313 = vadd.f32 %v311, %v312
        %v314 = vsel %vm222, %v183, 0.0
        %v315 = vrot.slane %v314, 4
        %v316 = vadd.f32 %v314, %v315
        %v317 = vrot.slane %v316, 2
        %v318 = vadd.f32 %v316, %v317
        %v319 = vrot.slane %v318, 1
        %v320 = vadd.f32 %v318, %v319
        %v321 = vsel %vm222, %v184, 0.0
        %v322 = vrot.slane %v321, 4
        %v323 = vadd.f32 %v321, %v322
        %v324 = vrot.slane %v323, 2
        %v325 = vadd.f32 %v323, %v324
        %v326 = vrot.slane %v325, 1
        %v327 = vadd.f32 %v325, %v326
        %v328 = vsel %vm222, %v185, 0.0
        %v329 = vrot.slane %v328, 4
        %v330 = vadd.f32 %v328, %v329
        %v331 = vrot.slane %v330, 2
        %v332 = vadd.f32 %v330, %v331
        %v333 = vrot.slane %v332, 1
        %v334 = vadd.f32 %v332, %v333
        %v335 = vsel %vm222, %v162, 0.0
        %v336 = vrot.slane %v335, 4
        %v337 = vadd.f32 %v335, %v336
        %v338 = vrot.slane %v337, 2
        %v339 = vadd.f32 %v337, %v338
        %v340 = vrot.slane %v339, 1
        %v341 = vadd.f32 %v339, %v340
        %v342 = vsel %vm222, %v186, 0.0
        %v343 = vrot.slane %v342, 4
        %v344 = vadd.f32 %v342, %v343
        %v345 = vrot.slane %v344, 2
        %v346 = vadd.f32 %v344, %v345
        %v347 = vrot.slane %v346, 1
        %v348 = vadd.f32 %v346, %v347
        %v349 = vsel %vm222, %v187, 0.0
        %v350 = vrot.slane %v349, 4
        %v351 = vadd.f32 %v349, %v350
        %v352 = vrot.slane %v351, 2
        %v353 = vadd.f32 %v351, %v352
        %v354 = vrot.slane %v353, 1
        %v355 = vadd.f32 %v353, %v354
        %v356 = vsel %vm222, %v188, 0.0
        %v357 = vrot.slane %v356, 4
        %v358 = vadd.f32 %v356, %v357
        %v359 = vrot.slane %v358, 2
        %v360 = vadd.f32 %v358, %v359
        %v361 = vrot.slane %v360, 1
        %v362 = vadd.f32 %v360, %v361
        %v363 = vsel %vm222, %v163, 0.0
        %v364 = vrot.slane %v363, 4
        %v365 = vadd.f32 %v363, %v364
        %v366 = vrot.slane %v365, 2
        %v367 = vadd.f32 %v365, %v366
        %v368 = vrot.slane %v367, 1
        %v369 = vadd.f32 %v367, %v368
        %v370 = vsel %vm222, %v189, 0.0
        %v371 = vrot.slane %v370, 4
        %v372 = vadd.f32 %v370, %v371
        %v373 = vrot.slane %v372, 2
        %v374 = vadd.f32 %v372, %v373
        %v375 = vrot.slane %v374, 1
        %v376 = vadd.f32 %v374, %v375
        %v377 = vsel %vm222, %v190, 0.0
        %v378 = vrot.slane %v377, 4
        %v379 = vadd.f32 %v377, %v378
        %v380 = vrot.slane %v379, 2
        %v381 = vadd.f32 %v379, %v380
        %v382 = vrot.slane %v381, 1
        %v383 = vadd.f32 %v381, %v382
        %v384 = vsel %vm222, %v191, 0.0
        %v385 = vrot.slane %v384, 4
        %v386 = vadd.f32 %v384, %v385
        %v387 = vrot.slane %v386, 2
        %v388 = vadd.f32 %v386, %v387
        %v389 = vrot.slane %v388, 1
        %v390 = vadd.f32 %v388, %v389
        %v391 = vsel %vm222, %v164, 0.0
        %v392 = vrot.slane %v391, 4
        %v393 = vadd.f32 %v391, %v392
        %v394 = vrot.slane %v393, 2
        %v395 = vadd.f32 %v393, %v394
        %v396 = vrot.slane %v395, 1
        %v397 = vadd.f32 %v395, %v396
        %v398 = vsel %vm222, %v192, 0.0
        %v399 = vrot.slane %v398, 4
        %v400 = vadd.f32 %v398, %v399
        %v401 = vrot.slane %v400, 2
        %v402 = vadd.f32 %v400, %v401
        %v403 = vrot.slane %v402, 1
        %v404 = vadd.f32 %v402, %v403
        %v405 = vsel %vm222, %v193, 0.0
        %v406 = vrot.slane %v405, 4
        %v407 = vadd.f32 %v405, %v406
        %v408 = vrot.slane %v407, 2
        %v409 = vadd.f32 %v407, %v408
        %v410 = vrot.slane %v409, 1
        %v411 = vadd.f32 %v409, %v410
        %v412 = vsel %vm222, %v194, 0.0
        %v413 = vrot.slane %v412, 4
        %v414 = vadd.f32 %v412, %v413
        %v415 = vrot.slane %v414, 2
        %v416 = vadd.f32 %v414, %v415
        %v417 = vrot.slane %v416, 1
        %v418 = vadd.f32 %v416, %v417
        %v419 = vsel %vm222, %v165, 0.0
        %v420 = vrot.slane %v419, 4
        %v421 = vadd.f32 %v419, %v420
        %v422 = vrot.slane %v421, 2
        %v423 = vadd.f32 %v421, %v422
        %v424 = vrot.slane %v423, 1
        %v425 = vadd.f32 %v423, %v424
        %v426 = vsel %vm222, %v195, 0.0
        %v427 = vrot.slane %v426, 4
        %v428 = vadd.f32 %v426, %v427
        %v429 = vrot.slane %v428, 2
        %v430 = vadd.f32 %v428, %v429
        %v431 = vrot.slane %v430, 1
        %v432 = vadd.f32 %v430, %v431
        %v433 = vsel %vm222, %v196, 0.0
        %v434 = vrot.slane %v433, 4
        %v435 = vadd.f32 %v433, %v434
        %v436 = vrot.slane %v435, 2
        %v437 = vadd.f32 %v435, %v436
        %v438 = vrot.slane %v437, 1
        %v439 = vadd.f32 %v437, %v438
        %v440 = vsel %vm222, %v197, 0.0
        %v441 = vrot.slane %v440, 4
        %v442 = vadd.f32 %v440, %v441
        %v443 = vrot.slane %v442, 2
        %v444 = vadd.f32 %v442, %v443
        %v445 = vrot.slane %v444, 1
        %v446 = vadd.f32 %v444, %v445
        %479 = vrot.lane.b32.xlu0 %v229, 126
        %v480 = vpop.permute.xlu0 %479
        %481 = vrot.lane.b32.xlu0 %v236, 126
        %v482 = vpop.permute.xlu0 %481
        %483 = vrot.lane.b32.xlu0 %v243, 126
        %v484 = vpop.permute.xlu0 %483
        %485 = vrot.lane.b32.xlu0 %v250, 126
        %v486 = vpop.permute.xlu0 %485
        %487 = vrot.lane.b32.xlu0 %v257, 126
        %v488 = vpop.permute.xlu0 %487
        %489 = vrot.lane.b32.xlu0 %v264, 126
        %v490 = vpop.permute.xlu0 %489
        %491 = vrot.lane.b32.xlu0 %v271, 126
        %v492 = vpop.permute.xlu0 %491
        %493 = vrot.lane.b32.xlu0 %v278, 126
        %v494 = vpop.permute.xlu0 %493
        %495 = vrot.lane.b32.xlu0 %v285, 126
        %v496 = vpop.permute.xlu0 %495
        %497 = vrot.lane.b32.xlu0 %v292, 126
        %v498 = vpop.permute.xlu0 %497
        %499 = vrot.lane.b32.xlu0 %v299, 126
        %v500 = vpop.permute.xlu0 %499
        %501 = vrot.lane.b32.xlu0 %v306, 126
        %v502 = vpop.permute.xlu0 %501
        %503 = vrot.lane.b32.xlu0 %v313, 126
        %v504 = vpop.permute.xlu0 %503
        %505 = vrot.lane.b32.xlu0 %v320, 126
        %v506 = vpop.permute.xlu0 %505
        %507 = vrot.lane.b32.xlu0 %v327, 126
        %v508 = vpop.permute.xlu0 %507
        %509 = vrot.lane.b32.xlu0 %v334, 126
        %v510 = vpop.permute.xlu0 %509
        %511 = vrot.lane.b32.xlu0 %v341, 126
        %v512 = vpop.permute.xlu0 %511
        %513 = vrot.lane.b32.xlu0 %v348, 126
        %v514 = vpop.permute.xlu0 %513
        %515 = vrot.lane.b32.xlu0 %v355, 126
        %v516 = vpop.permute.xlu0 %515
        %517 = vrot.lane.b32.xlu0 %v362, 126
        %v518 = vpop.permute.xlu0 %517
        %519 = vrot.lane.b32.xlu0 %v369, 126
        %v520 = vpop.permute.xlu0 %519
        %521 = vrot.lane.b32.xlu0 %v376, 126
        %v522 = vpop.permute.xlu0 %521
        %523 = vrot.lane.b32.xlu0 %v383, 126
        %v524 = vpop.permute.xlu0 %523
        %525 = vrot.lane.b32.xlu0 %v390, 126
        %v526 = vpop.permute.xlu0 %525
        %527 = vrot.lane.b32.xlu0 %v397, 126
        %v528 = vpop.permute.xlu0 %527
        %529 = vrot.lane.b32.xlu0 %v404, 126
        %v530 = vpop.permute.xlu0 %529
        %531 = vrot.lane.b32.xlu0 %v411, 126
        %v532 = vpop.permute.xlu0 %531
        %533 = vrot.lane.b32.xlu0 %v418, 126
        %v534 = vpop.permute.xlu0 %533
        %535 = vrot.lane.b32.xlu0 %v425, 126
        %v536 = vpop.permute.xlu0 %535
        %537 = vrot.lane.b32.xlu0 %v432, 126
        %v538 = vpop.permute.xlu0 %537
        %539 = vrot.lane.b32.xlu0 %v439, 126
        %v540 = vpop.permute.xlu0 %539
        %541 = vrot.lane.b32.xlu0 %v446, 126
        %v542 = vpop.permute.xlu0 %541
        %543 = vrot.lane.b32.xlu0 %v229, 124
        %v544 = vpop.permute.xlu0 %543
        %545 = vrot.lane.b32.xlu0 %v236, 124
        %v546 = vpop.permute.xlu0 %545
        %547 = vrot.lane.b32.xlu0 %v243, 124
        %v548 = vpop.permute.xlu0 %547
        %549 = vrot.lane.b32.xlu0 %v250, 124
        %v550 = vpop.permute.xlu0 %549
        %551 = vrot.lane.b32.xlu0 %v257, 124
        %v552 = vpop.permute.xlu0 %551
        %553 = vrot.lane.b32.xlu0 %v264, 124
        %v554 = vpop.permute.xlu0 %553
        %555 = vrot.lane.b32.xlu0 %v271, 124
        %v556 = vpop.permute.xlu0 %555
        %557 = vrot.lane.b32.xlu0 %v278, 124
        %v558 = vpop.permute.xlu0 %557
        %559 = vrot.lane.b32.xlu0 %v285, 124
        %v560 = vpop.permute.xlu0 %559
        %561 = vrot.lane.b32.xlu0 %v292, 124
        %v562 = vpop.permute.xlu0 %561
        %563 = vrot.lane.b32.xlu0 %v299, 124
        %v564 = vpop.permute.xlu0 %563
        %565 = vrot.lane.b32.xlu0 %v306, 124
        %v566 = vpop.permute.xlu0 %565
        %567 = vrot.lane.b32.xlu0 %v313, 124
        %v568 = vpop.permute.xlu0 %567
        %569 = vrot.lane.b32.xlu0 %v320, 124
        %v570 = vpop.permute.xlu0 %569
        %571 = vrot.lane.b32.xlu0 %v327, 124
        %v572 = vpop.permute.xlu0 %571
        %573 = vrot.lane.b32.xlu0 %v334, 124
        %v574 = vpop.permute.xlu0 %573
        %575 = vrot.lane.b32.xlu0 %v341, 124
        %v576 = vpop.permute.xlu0 %575
        %577 = vrot.lane.b32.xlu0 %v348, 124
        %v578 = vpop.permute.xlu0 %577
        %579 = vrot.lane.b32.xlu0 %v355, 124
        %v580 = vpop.permute.xlu0 %579
        %581 = vrot.lane.b32.xlu0 %v362, 124
        %v582 = vpop.permute.xlu0 %581
        %583 = vrot.lane.b32.xlu0 %v369, 124
        %v584 = vpop.permute.xlu0 %583
        %585 = vrot.lane.b32.xlu0 %v376, 124
        %v586 = vpop.permute.xlu0 %585
        %587 = vrot.lane.b32.xlu0 %v383, 124
        %v588 = vpop.permute.xlu0 %587
        %589 = vrot.lane.b32.xlu0 %v390, 124
        %v590 = vpop.permute.xlu0 %589
        %591 = vrot.lane.b32.xlu0 %v397, 124
        %v592 = vpop.permute.xlu0 %591
        %593 = vrot.lane.b32.xlu0 %v404, 124
        %v594 = vpop.permute.xlu0 %593
        %595 = vrot.lane.b32.xlu0 %v411, 124
        %v596 = vpop.permute.xlu0 %595
        %597 = vrot.lane.b32.xlu0 %v418, 124
        %v598 = vpop.permute.xlu0 %597
        %599 = vrot.lane.b32.xlu0 %v425, 124
        %v600 = vpop.permute.xlu0 %599
        %601 = vrot.lane.b32.xlu0 %v432, 124
        %v602 = vpop.permute.xlu0 %601
        %603 = vrot.lane.b32.xlu0 %v439, 124
        %v604 = vpop.permute.xlu0 %603
        %605 = vrot.lane.b32.xlu0 %v446, 124
        %v606 = vpop.permute.xlu0 %605
        %607 = vrot.lane.b32.xlu0 %v229, 122
        %v608 = vpop.permute.xlu0 %607
        %609 = vrot.lane.b32.xlu0 %v236, 122
        %v610 = vpop.permute.xlu0 %609
        %611 = vrot.lane.b32.xlu0 %v243, 122
        %v612 = vpop.permute.xlu0 %611
        %613 = vrot.lane.b32.xlu0 %v250, 122
        %v614 = vpop.permute.xlu0 %613
        %615 = vrot.lane.b32.xlu0 %v257, 122
        %v616 = vpop.permute.xlu0 %615
        %617 = vrot.lane.b32.xlu0 %v264, 122
        %v618 = vpop.permute.xlu0 %617
        %619 = vrot.lane.b32.xlu0 %v271, 122
        %v620 = vpop.permute.xlu0 %619
        %621 = vrot.lane.b32.xlu0 %v278, 122
        %v622 = vpop.permute.xlu0 %621
        %623 = vrot.lane.b32.xlu0 %v285, 122
        %v624 = vpop.permute.xlu0 %623
        %625 = vrot.lane.b32.xlu0 %v292, 122
        %v626 = vpop.permute.xlu0 %625
        %627 = vrot.lane.b32.xlu0 %v299, 122
        %v628 = vpop.permute.xlu0 %627
        %629 = vrot.lane.b32.xlu0 %v306, 122
        %v630 = vpop.permute.xlu0 %629
        %631 = vrot.lane.b32.xlu0 %v313, 122
        %v632 = vpop.permute.xlu0 %631
        %633 = vrot.lane.b32.xlu0 %v320, 122
        %v634 = vpop.permute.xlu0 %633
        %635 = vrot.lane.b32.xlu0 %v327, 122
        %v636 = vpop.permute.xlu0 %635
        %637 = vrot.lane.b32.xlu0 %v334, 122
        %v638 = vpop.permute.xlu0 %637
        %639 = vrot.lane.b32.xlu0 %v341, 122
        %v640 = vpop.permute.xlu0 %639
        %641 = vrot.lane.b32.xlu0 %v348, 122
        %v642 = vpop.permute.xlu0 %641
        %643 = vrot.lane.b32.xlu0 %v355, 122
        %v644 = vpop.permute.xlu0 %643
        %645 = vrot.lane.b32.xlu0 %v362, 122
        %v646 = vpop.permute.xlu0 %645
        %647 = vrot.lane.b32.xlu0 %v369, 122
        %v648 = vpop.permute.xlu0 %647
        %649 = vrot.lane.b32.xlu0 %v376, 122
        %v650 = vpop.permute.xlu0 %649
        %651 = vrot.lane.b32.xlu0 %v383, 122
        %v652 = vpop.permute.xlu0 %651
        %653 = vrot.lane.b32.xlu0 %v390, 122
        %v654 = vpop.permute.xlu0 %653
        %655 = vrot.lane.b32.xlu0 %v397, 122
        %v656 = vpop.permute.xlu0 %655
        %657 = vrot.lane.b32.xlu0 %v404, 122
        %v658 = vpop.permute.xlu0 %657
        %659 = vrot.lane.b32.xlu0 %v411, 122
        %v660 = vpop.permute.xlu0 %659
        %661 = vrot.lane.b32.xlu0 %v418, 122
        %v662 = vpop.permute.xlu0 %661
        %663 = vrot.lane.b32.xlu0 %v425, 122
        %v664 = vpop.permute.xlu0 %663
        %665 = vrot.lane.b32.xlu0 %v432, 122
        %v666 = vpop.permute.xlu0 %665
        %667 = vrot.lane.b32.xlu0 %v439, 122
        %v668 = vpop.permute.xlu0 %667
        %669 = vrot.lane.b32.xlu0 %v446, 122
        %v670 = vpop.permute.xlu0 %669
        %671 = vrot.lane.b32.xlu0 %v229, 120
        %v672 = vpop.permute.xlu0 %671
        %673 = vrot.lane.b32.xlu0 %v236, 120
        %v674 = vpop.permute.xlu0 %673
        %675 = vrot.lane.b32.xlu0 %v243, 120
        %v676 = vpop.permute.xlu0 %675
        %677 = vrot.lane.b32.xlu0 %v250, 120
        %v678 = vpop.permute.xlu0 %677
        %679 = vrot.lane.b32.xlu0 %v257, 120
        %v680 = vpop.permute.xlu0 %679
        %681 = vrot.lane.b32.xlu0 %v264, 120
        %v682 = vpop.permute.xlu0 %681
        %683 = vrot.lane.b32.xlu0 %v271, 120
        %v684 = vpop.permute.xlu0 %683
        %685 = vrot.lane.b32.xlu0 %v278, 120
        %v686 = vpop.permute.xlu0 %685
        %687 = vrot.lane.b32.xlu0 %v285, 120
        %v688 = vpop.permute.xlu0 %687
        %689 = vrot.lane.b32.xlu0 %v292, 120
        %v690 = vpop.permute.xlu0 %689
        %691 = vrot.lane.b32.xlu0 %v299, 120
        %v692 = vpop.permute.xlu0 %691
        %693 = vrot.lane.b32.xlu0 %v306, 120
        %v694 = vpop.permute.xlu0 %693
        %695 = vrot.lane.b32.xlu0 %v313, 120
        %v696 = vpop.permute.xlu0 %695
        %697 = vrot.lane.b32.xlu0 %v320, 120
        %v698 = vpop.permute.xlu0 %697
        %699 = vrot.lane.b32.xlu0 %v327, 120
        %v700 = vpop.permute.xlu0 %699
        %701 = vrot.lane.b32.xlu0 %v334, 120
        %v702 = vpop.permute.xlu0 %701
        %703 = vrot.lane.b32.xlu0 %v341, 120
        %v704 = vpop.permute.xlu0 %703
        %705 = vrot.lane.b32.xlu0 %v348, 120
        %v706 = vpop.permute.xlu0 %705
        %707 = vrot.lane.b32.xlu0 %v355, 120
        %v708 = vpop.permute.xlu0 %707
        %709 = vrot.lane.b32.xlu0 %v362, 120
        %v710 = vpop.permute.xlu0 %709
        %711 = vrot.lane.b32.xlu0 %v369, 120
        %v712 = vpop.permute.xlu0 %711
        %713 = vrot.lane.b32.xlu0 %v376, 120
        %v714 = vpop.permute.xlu0 %713
        %715 = vrot.lane.b32.xlu0 %v383, 120
        %v716 = vpop.permute.xlu0 %715
        %717 = vrot.lane.b32.xlu0 %v390, 120
        %v718 = vpop.permute.xlu0 %717
        %719 = vrot.lane.b32.xlu0 %v397, 120
        %v720 = vpop.permute.xlu0 %719
        %721 = vrot.lane.b32.xlu0 %v404, 120
        %v722 = vpop.permute.xlu0 %721
        %723 = vrot.lane.b32.xlu0 %v411, 120
        %v724 = vpop.permute.xlu0 %723
        %725 = vrot.lane.b32.xlu0 %v418, 120
        %v726 = vpop.permute.xlu0 %725
        %727 = vrot.lane.b32.xlu0 %v425, 120
        %v728 = vpop.permute.xlu0 %727
        %729 = vrot.lane.b32.xlu0 %v432, 120
        %v730 = vpop.permute.xlu0 %729
        %731 = vrot.lane.b32.xlu0 %v439, 120
        %v732 = vpop.permute.xlu0 %731
        %733 = vrot.lane.b32.xlu0 %v446, 120
        %v734 = vpop.permute.xlu0 %733
        %735 = vrot.lane.b32.xlu0 %v229, 118
        %v736 = vpop.permute.xlu0 %735
        %737 = vrot.lane.b32.xlu0 %v236, 118
        %v738 = vpop.permute.xlu0 %737
        %739 = vrot.lane.b32.xlu0 %v243, 118
        %v740 = vpop.permute.xlu0 %739
        %741 = vrot.lane.b32.xlu0 %v250, 118
        %v742 = vpop.permute.xlu0 %741
        %743 = vrot.lane.b32.xlu0 %v257, 118
        %v744 = vpop.permute.xlu0 %743
        %745 = vrot.lane.b32.xlu0 %v264, 118
        %v746 = vpop.permute.xlu0 %745
        %747 = vrot.lane.b32.xlu0 %v271, 118
        %v748 = vpop.permute.xlu0 %747
        %749 = vrot.lane.b32.xlu0 %v278, 118
        %v750 = vpop.permute.xlu0 %749
        %751 = vrot.lane.b32.xlu0 %v285, 118
        %v752 = vpop.permute.xlu0 %751
        %753 = vrot.lane.b32.xlu0 %v292, 118
        %v754 = vpop.permute.xlu0 %753
        %755 = vrot.lane.b32.xlu0 %v299, 118
        %v756 = vpop.permute.xlu0 %755
        %757 = vrot.lane.b32.xlu0 %v306, 118
        %v758 = vpop.permute.xlu0 %757
        %759 = vrot.lane.b32.xlu0 %v313, 118
        %v760 = vpop.permute.xlu0 %759
        %761 = vrot.lane.b32.xlu0 %v320, 118
        %v762 = vpop.permute.xlu0 %761
        %763 = vrot.lane.b32.xlu0 %v327, 118
        %v764 = vpop.permute.xlu0 %763
        %765 = vrot.lane.b32.xlu0 %v334, 118
        %v766 = vpop.permute.xlu0 %765
        %767 = vrot.lane.b32.xlu0 %v341, 118
        %v768 = vpop.permute.xlu0 %767
        %769 = vrot.lane.b32.xlu0 %v348, 118
        %v770 = vpop.permute.xlu0 %769
        %771 = vrot.lane.b32.xlu0 %v355, 118
        %v772 = vpop.permute.xlu0 %771
        %773 = vrot.lane.b32.xlu0 %v362, 118
        %v774 = vpop.permute.xlu0 %773
        %775 = vrot.lane.b32.xlu0 %v369, 118
        %v776 = vpop.permute.xlu0 %775
        %777 = vrot.lane.b32.xlu0 %v376, 118
        %v778 = vpop.permute.xlu0 %777
        %779 = vrot.lane.b32.xlu0 %v383, 118
        %v780 = vpop.permute.xlu0 %779
        %781 = vrot.lane.b32.xlu0 %v390, 118
        %v782 = vpop.permute.xlu0 %781
        %783 = vrot.lane.b32.xlu0 %v397, 118
        %v784 = vpop.permute.xlu0 %783
        %785 = vrot.lane.b32.xlu0 %v404, 118
        %v786 = vpop.permute.xlu0 %785
        %787 = vrot.lane.b32.xlu0 %v411, 118
        %v788 = vpop.permute.xlu0 %787
        %789 = vrot.lane.b32.xlu0 %v418, 118
        %v790 = vpop.permute.xlu0 %789
        %791 = vrot.lane.b32.xlu0 %v425, 118
        %v792 = vpop.permute.xlu0 %791
        %793 = vrot.lane.b32.xlu0 %v432, 118
        %v794 = vpop.permute.xlu0 %793
        %795 = vrot.lane.b32.xlu0 %v439, 118
        %v796 = vpop.permute.xlu0 %795
        %797 = vrot.lane.b32.xlu0 %v446, 118
        %v798 = vpop.permute.xlu0 %797
        %799 = vrot.lane.b32.xlu0 %v229, 116
        %v800 = vpop.permute.xlu0 %799
        %801 = vrot.lane.b32.xlu0 %v236, 116
        %v802 = vpop.permute.xlu0 %801
        %803 = vrot.lane.b32.xlu0 %v243, 116
        %v804 = vpop.permute.xlu0 %803
        %805 = vrot.lane.b32.xlu0 %v250, 116
        %v806 = vpop.permute.xlu0 %805
        %807 = vrot.lane.b32.xlu0 %v257, 116
        %v808 = vpop.permute.xlu0 %807
        %809 = vrot.lane.b32.xlu0 %v264, 116
        %v810 = vpop.permute.xlu0 %809
        %811 = vrot.lane.b32.xlu0 %v271, 116
        %v812 = vpop.permute.xlu0 %811
        %813 = vrot.lane.b32.xlu0 %v278, 116
        %v814 = vpop.permute.xlu0 %813
        %815 = vrot.lane.b32.xlu0 %v285, 116
        %v816 = vpop.permute.xlu0 %815
        %817 = vrot.lane.b32.xlu0 %v292, 116
        %v818 = vpop.permute.xlu0 %817
        %819 = vrot.lane.b32.xlu0 %v299, 116
        %v820 = vpop.permute.xlu0 %819
        %821 = vrot.lane.b32.xlu0 %v306, 116
        %v822 = vpop.permute.xlu0 %821
        %823 = vrot.lane.b32.xlu0 %v313, 116
        %v824 = vpop.permute.xlu0 %823
        %825 = vrot.lane.b32.xlu0 %v320, 116
        %v826 = vpop.permute.xlu0 %825
        %827 = vrot.lane.b32.xlu0 %v327, 116
        %v828 = vpop.permute.xlu0 %827
        %829 = vrot.lane.b32.xlu0 %v334, 116
        %v830 = vpop.permute.xlu0 %829
        %831 = vrot.lane.b32.xlu0 %v341, 116
        %v832 = vpop.permute.xlu0 %831
        %833 = vrot.lane.b32.xlu0 %v348, 116
        %v834 = vpop.permute.xlu0 %833
        %835 = vrot.lane.b32.xlu0 %v355, 116
        %v836 = vpop.permute.xlu0 %835
        %837 = vrot.lane.b32.xlu0 %v362, 116
        %v838 = vpop.permute.xlu0 %837
        %839 = vrot.lane.b32.xlu0 %v369, 116
        %v840 = vpop.permute.xlu0 %839
        %841 = vrot.lane.b32.xlu0 %v376, 116
        %v842 = vpop.permute.xlu0 %841
        %843 = vrot.lane.b32.xlu0 %v383, 116
        %v844 = vpop.permute.xlu0 %843
        %845 = vrot.lane.b32.xlu0 %v390, 116
        %v846 = vpop.permute.xlu0 %845
        %847 = vrot.lane.b32.xlu0 %v397, 116
        %v848 = vpop.permute.xlu0 %847
        %849 = vrot.lane.b32.xlu0 %v404, 116
        %v850 = vpop.permute.xlu0 %849
        %851 = vrot.lane.b32.xlu0 %v411, 116
        %v852 = vpop.permute.xlu0 %851
        %853 = vrot.lane.b32.xlu0 %v418, 116
        %v854 = vpop.permute.xlu0 %853
        %855 = vrot.lane.b32.xlu0 %v425, 116
        %v856 = vpop.permute.xlu0 %855
        %857 = vrot.lane.b32.xlu0 %v432, 116
        %v858 = vpop.permute.xlu0 %857
        %859 = vrot.lane.b32.xlu0 %v439, 116
        %v860 = vpop.permute.xlu0 %859
        %861 = vrot.lane.b32.xlu0 %v446, 116
        %v862 = vpop.permute.xlu0 %861
        %863 = vrot.lane.b32.xlu0 %v229, 114
        %v864 = vpop.permute.xlu0 %863
        %865 = vrot.lane.b32.xlu0 %v236, 114
        %v866 = vpop.permute.xlu0 %865
        %867 = vrot.lane.b32.xlu0 %v243, 114
        %v868 = vpop.permute.xlu0 %867
        %869 = vrot.lane.b32.xlu0 %v250, 114
        %v870 = vpop.permute.xlu0 %869
        %871 = vrot.lane.b32.xlu0 %v257, 114
        %v872 = vpop.permute.xlu0 %871
        %873 = vrot.lane.b32.xlu0 %v264, 114
        %v874 = vpop.permute.xlu0 %873
        %875 = vrot.lane.b32.xlu0 %v271, 114
        %v876 = vpop.permute.xlu0 %875
        %877 = vrot.lane.b32.xlu0 %v278, 114
        %v878 = vpop.permute.xlu0 %877
        %879 = vrot.lane.b32.xlu0 %v285, 114
        %v880 = vpop.permute.xlu0 %879
        %881 = vrot.lane.b32.xlu0 %v292, 114
        %v882 = vpop.permute.xlu0 %881
        %883 = vrot.lane.b32.xlu0 %v299, 114
        %v884 = vpop.permute.xlu0 %883
        %885 = vrot.lane.b32.xlu0 %v306, 114
        %v886 = vpop.permute.xlu0 %885
        %887 = vrot.lane.b32.xlu0 %v313, 114
        %v888 = vpop.permute.xlu0 %887
        %889 = vrot.lane.b32.xlu0 %v320, 114
        %v890 = vpop.permute.xlu0 %889
        %891 = vrot.lane.b32.xlu0 %v327, 114
        %v892 = vpop.permute.xlu0 %891
        %893 = vrot.lane.b32.xlu0 %v334, 114
        %v894 = vpop.permute.xlu0 %893
        %895 = vrot.lane.b32.xlu0 %v341, 114
        %v896 = vpop.permute.xlu0 %895
        %897 = vrot.lane.b32.xlu0 %v348, 114
        %v898 = vpop.permute.xlu0 %897
        %899 = vrot.lane.b32.xlu0 %v355, 114
        %v900 = vpop.permute.xlu0 %899
        %901 = vrot.lane.b32.xlu0 %v362, 114
        %v902 = vpop.permute.xlu0 %901
        %903 = vrot.lane.b32.xlu0 %v369, 114
        %v904 = vpop.permute.xlu0 %903
        %905 = vrot.lane.b32.xlu0 %v376, 114
        %v906 = vpop.permute.xlu0 %905
        %907 = vrot.lane.b32.xlu0 %v383, 114
        %v908 = vpop.permute.xlu0 %907
        %909 = vrot.lane.b32.xlu0 %v390, 114
        %v910 = vpop.permute.xlu0 %909
        %911 = vrot.lane.b32.xlu0 %v397, 114
        %v912 = vpop.permute.xlu0 %911
        %913 = vrot.lane.b32.xlu0 %v404, 114
        %v914 = vpop.permute.xlu0 %913
        %915 = vrot.lane.b32.xlu0 %v411, 114
        %v916 = vpop.permute.xlu0 %915
        %917 = vrot.lane.b32.xlu0 %v418, 114
        %v918 = vpop.permute.xlu0 %917
        %919 = vrot.lane.b32.xlu0 %v425, 114
        %v920 = vpop.permute.xlu0 %919
        %921 = vrot.lane.b32.xlu0 %v432, 114
        %v922 = vpop.permute.xlu0 %921
        %923 = vrot.lane.b32.xlu0 %v439, 114
        %v924 = vpop.permute.xlu0 %923
        %925 = vrot.lane.b32.xlu0 %v446, 114
        %v926 = vpop.permute.xlu0 %925
        %v927 = vrot.slane %v236, 7
        %vm928 = vcmask 1041409
        %v929 = vsel %vm928, %v927, %v229
        %v930 = vrot.slane %v243, 6
        %vm931 = vcmask 1042434
        %v932 = vsel %vm931, %v930, %v929
        %v933 = vrot.slane %v250, 5
        %vm934 = vcmask 1043459
        %v935 = vsel %vm934, %v933, %v932
        %v936 = vrot.slane %v257, 4
        %vm937 = vcmask 1044484
        %v938 = vsel %vm937, %v936, %v935
        %v939 = vrot.slane %v264, 3
        %vm940 = vcmask 1045509
        %v941 = vsel %vm940, %v939, %v938
        %v942 = vrot.slane %v271, 2
        %vm943 = vcmask 1046534
        %v944 = vsel %vm943, %v942, %v941
        %v945 = vrot.slane %v278, 1
        %vm946 = vcmask 1047559
        %v947 = vsel %vm946, %v945, %v944
        %v948 = vrot.slane %v482, 7
        %v949 = vsel %vm928, %v948, %v480
        %v950 = vrot.slane %v484, 6
        %v951 = vsel %vm931, %v950, %v949
        %v952 = vrot.slane %v486, 5
        %v953 = vsel %vm934, %v952, %v951
        %v954 = vrot.slane %v488, 4
        %v955 = vsel %vm937, %v954, %v953
        %v956 = vrot.slane %v490, 3
        %v957 = vsel %vm940, %v956, %v955
        %v958 = vrot.slane %v492, 2
        %v959 = vsel %vm943, %v958, %v957
        %v960 = vrot.slane %v494, 1
        %v961 = vsel %vm946, %v960, %v959
        %v962 = vrot.slane %v546, 7
        %v963 = vsel %vm928, %v962, %v544
        %v964 = vrot.slane %v548, 6
        %v965 = vsel %vm931, %v964, %v963
        %v966 = vrot.slane %v550, 5
        %v967 = vsel %vm934, %v966, %v965
        %v968 = vrot.slane %v552, 4
        %v969 = vsel %vm937, %v968, %v967
        %v970 = vrot.slane %v554, 3
        %v971 = vsel %vm940, %v970, %v969
        %v972 = vrot.slane %v556, 2
        %v973 = vsel %vm943, %v972, %v971
        %v974 = vrot.slane %v558, 1
        %v975 = vsel %vm946, %v974, %v973
        %v976 = vrot.slane %v610, 7
        %v977 = vsel %vm928, %v976, %v608
        %v978 = vrot.slane %v612, 6
        %v979 = vsel %vm931, %v978, %v977
        %v980 = vrot.slane %v614, 5
        %v981 = vsel %vm934, %v980, %v979
        %v982 = vrot.slane %v616, 4
        %v983 = vsel %vm937, %v982, %v981
        %v984 = vrot.slane %v618, 3
        %v985 = vsel %vm940, %v984, %v983
        %v986 = vrot.slane %v620, 2
        %v987 = vsel %vm943, %v986, %v985
        %v988 = vrot.slane %v622, 1
        %v989 = vsel %vm946, %v988, %v987
        %v990 = vrot.slane %v674, 7
        %v991 = vsel %vm928, %v990, %v672
        %v992 = vrot.slane %v676, 6
        %v993 = vsel %vm931, %v992, %v991
        %v994 = vrot.slane %v678, 5
        %v995 = vsel %vm934, %v994, %v993
        %v996 = vrot.slane %v680, 4
        %v997 = vsel %vm937, %v996, %v995
        %v998 = vrot.slane %v682, 3
        %v999 = vsel %vm940, %v998, %v997
        %v1000 = vrot.slane %v684, 2
        %v1001 = vsel %vm943, %v1000, %v999
        %v1002 = vrot.slane %v686, 1
        %v1003 = vsel %vm946, %v1002, %v1001
        %v1004 = vrot.slane %v738, 7
        %v1005 = vsel %vm928, %v1004, %v736
        %v1006 = vrot.slane %v740, 6
        %v1007 = vsel %vm931, %v1006, %v1005
        %v1008 = vrot.slane %v742, 5
        %v1009 = vsel %vm934, %v1008, %v1007
        %v1010 = vrot.slane %v744, 4
        %v1011 = vsel %vm937, %v1010, %v1009
        %v1012 = vrot.slane %v746, 3
        %v1013 = vsel %vm940, %v1012, %v1011
        %v1014 = vrot.slane %v748, 2
        %v1015 = vsel %vm943, %v1014, %v1013
        %v1016 = vrot.slane %v750, 1
        %v1017 = vsel %vm946, %v1016, %v1015
        %v1018 = vrot.slane %v802, 7
        %v1019 = vsel %vm928, %v1018, %v800
        %v1020 = vrot.slane %v804, 6
        %v1021 = vsel %vm931, %v1020, %v1019
        %v1022 = vrot.slane %v806, 5
        %v1023 = vsel %vm934, %v1022, %v1021
        %v1024 = vrot.slane %v808, 4
        %v1025 = vsel %vm937, %v1024, %v1023
        %v1026 = vrot.slane %v810, 3
        %v1027 = vsel %vm940, %v1026, %v1025
        %v1028 = vrot.slane %v812, 2
        %v1029 = vsel %vm943, %v1028, %v1027
        %v1030 = vrot.slane %v814, 1
        %v1031 = vsel %vm946, %v1030, %v1029
        %v1032 = vrot.slane %v866, 7
        %v1033 = vsel %vm928, %v1032, %v864
        %v1034 = vrot.slane %v868, 6
        %v1035 = vsel %vm931, %v1034, %v1033
        %v1036 = vrot.slane %v870, 5
        %v1037 = vsel %vm934, %v1036, %v1035
        %v1038 = vrot.slane %v872, 4
        %v1039 = vsel %vm937, %v1038, %v1037
        %v1040 = vrot.slane %v874, 3
        %v1041 = vsel %vm940, %v1040, %v1039
        %v1042 = vrot.slane %v876, 2
        %v1043 = vsel %vm943, %v1042, %v1041
        %v1044 = vrot.slane %v878, 1
        %v1045 = vsel %vm946, %v1044, %v1043
        %v1046 = vrot.slane %v292, 7
        %v1047 = vsel %vm928, %v1046, %v285
        %v1048 = vrot.slane %v299, 6
        %v1049 = vsel %vm931, %v1048, %v1047
        %v1050 = vrot.slane %v306, 5
        %v1051 = vsel %vm934, %v1050, %v1049
        %v1052 = vrot.slane %v313, 4
        %v1053 = vsel %vm937, %v1052, %v1051
        %v1054 = vrot.slane %v320, 3
        %v1055 = vsel %vm940, %v1054, %v1053
        %v1056 = vrot.slane %v327, 2
        %v1057 = vsel %vm943, %v1056, %v1055
        %v1058 = vrot.slane %v334, 1
        %v1059 = vsel %vm946, %v1058, %v1057
        %v1060 = vrot.slane %v498, 7
        %v1061 = vsel %vm928, %v1060, %v496
        %v1062 = vrot.slane %v500, 6
        %v1063 = vsel %vm931, %v1062, %v1061
        %v1064 = vrot.slane %v502, 5
        %v1065 = vsel %vm934, %v1064, %v1063
        %v1066 = vrot.slane %v504, 4
        %v1067 = vsel %vm937, %v1066, %v1065
        %v1068 = vrot.slane %v506, 3
        %v1069 = vsel %vm940, %v1068, %v1067
        %v1070 = vrot.slane %v508, 2
        %v1071 = vsel %vm943, %v1070, %v1069
        %v1072 = vrot.slane %v510, 1
        %v1073 = vsel %vm946, %v1072, %v1071
        %v1074 = vrot.slane %v562, 7
        %v1075 = vsel %vm928, %v1074, %v560
        %v1076 = vrot.slane %v564, 6
        %v1077 = vsel %vm931, %v1076, %v1075
        %v1078 = vrot.slane %v566, 5
        %v1079 = vsel %vm934, %v1078, %v1077
        %v1080 = vrot.slane %v568, 4
        %v1081 = vsel %vm937, %v1080, %v1079
        %v1082 = vrot.slane %v570, 3
        %v1083 = vsel %vm940, %v1082, %v1081
        %v1084 = vrot.slane %v572, 2
        %v1085 = vsel %vm943, %v1084, %v1083
        %v1086 = vrot.slane %v574, 1
        %v1087 = vsel %vm946, %v1086, %v1085
        %v1088 = vrot.slane %v626, 7
        %v1089 = vsel %vm928, %v1088, %v624
        %v1090 = vrot.slane %v628, 6
        %v1091 = vsel %vm931, %v1090, %v1089
        %v1092 = vrot.slane %v630, 5
        %v1093 = vsel %vm934, %v1092, %v1091
        %v1094 = vrot.slane %v632, 4
        %v1095 = vsel %vm937, %v1094, %v1093
        %v1096 = vrot.slane %v634, 3
        %v1097 = vsel %vm940, %v1096, %v1095
        %v1098 = vrot.slane %v636, 2
        %v1099 = vsel %vm943, %v1098, %v1097
        %v1100 = vrot.slane %v638, 1
        %v1101 = vsel %vm946, %v1100, %v1099
        %v1102 = vrot.slane %v690, 7
        %v1103 = vsel %vm928, %v1102, %v688
        %v1104 = vrot.slane %v692, 6
        %v1105 = vsel %vm931, %v1104, %v1103
        %v1106 = vrot.slane %v694, 5
        %v1107 = vsel %vm934, %v1106, %v1105
        %v1108 = vrot.slane %v696, 4
        %v1109 = vsel %vm937, %v1108, %v1107
        %v1110 = vrot.slane %v698, 3
        %v1111 = vsel %vm940, %v1110, %v1109
        %v1112 = vrot.slane %v700, 2
        %v1113 = vsel %vm943, %v1112, %v1111
        %v1114 = vrot.slane %v702, 1
        %v1115 = vsel %vm946, %v1114, %v1113
        %v1116 = vrot.slane %v754, 7
        %v1117 = vsel %vm928, %v1116, %v752
        %v1118 = vrot.slane %v756, 6
        %v1119 = vsel %vm931, %v1118, %v1117
        %v1120 = vrot.slane %v758, 5
        %v1121 = vsel %vm934, %v1120, %v1119
        %v1122 = vrot.slane %v760, 4
        %v1123 = vsel %vm937, %v1122, %v1121
        %v1124 = vrot.slane %v762, 3
        %v1125 = vsel %vm940, %v1124, %v1123
        %v1126 = vrot.slane %v764, 2
        %v1127 = vsel %vm943, %v1126, %v1125
        %v1128 = vrot.slane %v766, 1
        %v1129 = vsel %vm946, %v1128, %v1127
        %v1130 = vrot.slane %v818, 7
        %v1131 = vsel %vm928, %v1130, %v816
        %v1132 = vrot.slane %v820, 6
        %v1133 = vsel %vm931, %v1132, %v1131
        %v1134 = vrot.slane %v822, 5
        %v1135 = vsel %vm934, %v1134, %v1133
        %v1136 = vrot.slane %v824, 4
        %v1137 = vsel %vm937, %v1136, %v1135
        %v1138 = vrot.slane %v826, 3
        %v1139 = vsel %vm940, %v1138, %v1137
        %v1140 = vrot.slane %v828, 2
        %v1141 = vsel %vm943, %v1140, %v1139
        %v1142 = vrot.slane %v830, 1
        %v1143 = vsel %vm946, %v1142, %v1141
        %v1144 = vrot.slane %v882, 7
        %v1145 = vsel %vm928, %v1144, %v880
        %v1146 = vrot.slane %v884, 6
        %v1147 = vsel %vm931, %v1146, %v1145
        %v1148 = vrot.slane %v886, 5
        %v1149 = vsel %vm934, %v1148, %v1147
        %v1150 = vrot.slane %v888, 4
        %v1151 = vsel %vm937, %v1150, %v1149
        %v1152 = vrot.slane %v890, 3
        %v1153 = vsel %vm940, %v1152, %v1151
        %v1154 = vrot.slane %v892, 2
        %v1155 = vsel %vm943, %v1154, %v1153
        %v1156 = vrot.slane %v894, 1
        %v1157 = vsel %vm946, %v1156, %v1155
        %v1158 = vrot.slane %v348, 7
        %v1159 = vsel %vm928, %v1158, %v341
        %v1160 = vrot.slane %v355, 6
        %v1161 = vsel %vm931, %v1160, %v1159
        %v1162 = vrot.slane %v362, 5
        %v1163 = vsel %vm934, %v1162, %v1161
        %v1164 = vrot.slane %v369, 4
        %v1165 = vsel %vm937, %v1164, %v1163
        %v1166 = vrot.slane %v376, 3
        %v1167 = vsel %vm940, %v1166, %v1165
        %v1168 = vrot.slane %v383, 2
        %v1169 = vsel %vm943, %v1168, %v1167
        %v1170 = vrot.slane %v390, 1
        %v1171 = vsel %vm946, %v1170, %v1169
        %v1172 = vrot.slane %v514, 7
        %v1173 = vsel %vm928, %v1172, %v512
        %v1174 = vrot.slane %v516, 6
        %v1175 = vsel %vm931, %v1174, %v1173
        %v1176 = vrot.slane %v518, 5
        %v1177 = vsel %vm934, %v1176, %v1175
        %v1178 = vrot.slane %v520, 4
        %v1179 = vsel %vm937, %v1178, %v1177
        %v1180 = vrot.slane %v522, 3
        %v1181 = vsel %vm940, %v1180, %v1179
        %v1182 = vrot.slane %v524, 2
        %v1183 = vsel %vm943, %v1182, %v1181
        %v1184 = vrot.slane %v526, 1
        %v1185 = vsel %vm946, %v1184, %v1183
        %v1186 = vrot.slane %v578, 7
        %v1187 = vsel %vm928, %v1186, %v576
        %v1188 = vrot.slane %v580, 6
        %v1189 = vsel %vm931, %v1188, %v1187
        %v1190 = vrot.slane %v582, 5
        %v1191 = vsel %vm934, %v1190, %v1189
        %v1192 = vrot.slane %v584, 4
        %v1193 = vsel %vm937, %v1192, %v1191
        %v1194 = vrot.slane %v586, 3
        %v1195 = vsel %vm940, %v1194, %v1193
        %v1196 = vrot.slane %v588, 2
        %v1197 = vsel %vm943, %v1196, %v1195
        %v1198 = vrot.slane %v590, 1
        %v1199 = vsel %vm946, %v1198, %v1197
        %v1200 = vrot.slane %v642, 7
        %v1201 = vsel %vm928, %v1200, %v640
        %v1202 = vrot.slane %v644, 6
        %v1203 = vsel %vm931, %v1202, %v1201
        %v1204 = vrot.slane %v646, 5
        %v1205 = vsel %vm934, %v1204, %v1203
        %v1206 = vrot.slane %v648, 4
        %v1207 = vsel %vm937, %v1206, %v1205
        %v1208 = vrot.slane %v650, 3
        %v1209 = vsel %vm940, %v1208, %v1207
        %v1210 = vrot.slane %v652, 2
        %v1211 = vsel %vm943, %v1210, %v1209
        %v1212 = vrot.slane %v654, 1
        %v1213 = vsel %vm946, %v1212, %v1211
        %v1214 = vrot.slane %v706, 7
        %v1215 = vsel %vm928, %v1214, %v704
        %v1216 = vrot.slane %v708, 6
        %v1217 = vsel %vm931, %v1216, %v1215
        %v1218 = vrot.slane %v710, 5
        %v1219 = vsel %vm934, %v1218, %v1217
        %v1220 = vrot.slane %v712, 4
        %v1221 = vsel %vm937, %v1220, %v1219
        %v1222 = vrot.slane %v714, 3
        %v1223 = vsel %vm940, %v1222, %v1221
        %v1224 = vrot.slane %v716, 2
        %v1225 = vsel %vm943, %v1224, %v1223
        %v1226 = vrot.slane %v718, 1
        %v1227 = vsel %vm946, %v1226, %v1225
        %v1228 = vrot.slane %v770, 7
        %v1229 = vsel %vm928, %v1228, %v768
        %v1230 = vrot.slane %v772, 6
        %v1231 = vsel %vm931, %v1230, %v1229
        %v1232 = vrot.slane %v774, 5
        %v1233 = vsel %vm934, %v1232, %v1231
        %v1234 = vrot.slane %v776, 4
        %v1235 = vsel %vm937, %v1234, %v1233
        %v1236 = vrot.slane %v778, 3
        %v1237 = vsel %vm940, %v1236, %v1235
        %v1238 = vrot.slane %v780, 2
        %v1239 = vsel %vm943, %v1238, %v1237
        %v1240 = vrot.slane %v782, 1
        %v1241 = vsel %vm946, %v1240, %v1239
        %v1242 = vrot.slane %v834, 7
        %v1243 = vsel %vm928, %v1242, %v832
        %v1244 = vrot.slane %v836, 6
        %v1245 = vsel %vm931, %v1244, %v1243
        %v1246 = vrot.slane %v838, 5
        %v1247 = vsel %vm934, %v1246, %v1245
        %v1248 = vrot.slane %v840, 4
        %v1249 = vsel %vm937, %v1248, %v1247
        %v1250 = vrot.slane %v842, 3
        %v1251 = vsel %vm940, %v1250, %v1249
        %v1252 = vrot.slane %v844, 2
        %v1253 = vsel %vm943, %v1252, %v1251
        %v1254 = vrot.slane %v846, 1
        %v1255 = vsel %vm946, %v1254, %v1253
        %v1256 = vrot.slane %v898, 7
        %v1257 = vsel %vm928, %v1256, %v896
        %v1258 = vrot.slane %v900, 6
        %v1259 = vsel %vm931, %v1258, %v1257
        %v1260 = vrot.slane %v902, 5
        %v1261 = vsel %vm934, %v1260, %v1259
        %v1262 = vrot.slane %v904, 4
        %v1263 = vsel %vm937, %v1262, %v1261
        %v1264 = vrot.slane %v906, 3
        %v1265 = vsel %vm940, %v1264, %v1263
        %v1266 = vrot.slane %v908, 2
        %v1267 = vsel %vm943, %v1266, %v1265
        %v1268 = vrot.slane %v910, 1
        %v1269 = vsel %vm946, %v1268, %v1267
        %v1270 = vrot.slane %v404, 7
        %v1271 = vsel %vm928, %v1270, %v397
        %v1272 = vrot.slane %v411, 6
        %v1273 = vsel %vm931, %v1272, %v1271
        %v1274 = vrot.slane %v418, 5
        %v1275 = vsel %vm934, %v1274, %v1273
        %v1276 = vrot.slane %v425, 4
        %v1277 = vsel %vm937, %v1276, %v1275
        %v1278 = vrot.slane %v432, 3
        %v1279 = vsel %vm940, %v1278, %v1277
        %v1280 = vrot.slane %v439, 2
        %v1281 = vsel %vm943, %v1280, %v1279
        %v1282 = vrot.slane %v446, 1
        %v1283 = vsel %vm946, %v1282, %v1281
        %v1284 = vrot.slane %v530, 7
        %v1285 = vsel %vm928, %v1284, %v528
        %v1286 = vrot.slane %v532, 6
        %v1287 = vsel %vm931, %v1286, %v1285
        %v1288 = vrot.slane %v534, 5
        %v1289 = vsel %vm934, %v1288, %v1287
        %v1290 = vrot.slane %v536, 4
        %v1291 = vsel %vm937, %v1290, %v1289
        %v1292 = vrot.slane %v538, 3
        %v1293 = vsel %vm940, %v1292, %v1291
        %v1294 = vrot.slane %v540, 2
        %v1295 = vsel %vm943, %v1294, %v1293
        %v1296 = vrot.slane %v542, 1
        %v1297 = vsel %vm946, %v1296, %v1295
        %v1298 = vrot.slane %v594, 7
        %v1299 = vsel %vm928, %v1298, %v592
        %v1300 = vrot.slane %v596, 6
        %v1301 = vsel %vm931, %v1300, %v1299
        %v1302 = vrot.slane %v598, 5
        %v1303 = vsel %vm934, %v1302, %v1301
        %v1304 = vrot.slane %v600, 4
        %v1305 = vsel %vm937, %v1304, %v1303
        %v1306 = vrot.slane %v602, 3
        %v1307 = vsel %vm940, %v1306, %v1305
        %v1308 = vrot.slane %v604, 2
        %v1309 = vsel %vm943, %v1308, %v1307
        %v1310 = vrot.slane %v606, 1
        %v1311 = vsel %vm946, %v1310, %v1309
        %v1312 = vrot.slane %v658, 7
        %v1313 = vsel %vm928, %v1312, %v656
        %v1314 = vrot.slane %v660, 6
        %v1315 = vsel %vm931, %v1314, %v1313
        %v1316 = vrot.slane %v662, 5
        %v1317 = vsel %vm934, %v1316, %v1315
        %v1318 = vrot.slane %v664, 4
        %v1319 = vsel %vm937, %v1318, %v1317
        %v1320 = vrot.slane %v666, 3
        %v1321 = vsel %vm940, %v1320, %v1319
        %v1322 = vrot.slane %v668, 2
        %v1323 = vsel %vm943, %v1322, %v1321
        %v1324 = vrot.slane %v670, 1
        %v1325 = vsel %vm946, %v1324, %v1323
        %v1326 = vrot.slane %v722, 7
        %v1327 = vsel %vm928, %v1326, %v720
        %v1328 = vrot.slane %v724, 6
        %v1329 = vsel %vm931, %v1328, %v1327
        %v1330 = vrot.slane %v726, 5
        %v1331 = vsel %vm934, %v1330, %v1329
        %v1332 = vrot.slane %v728, 4
        %v1333 = vsel %vm937, %v1332, %v1331
        %v1334 = vrot.slane %v730, 3
        %v1335 = vsel %vm940, %v1334, %v1333
        %v1336 = vrot.slane %v732, 2
        %v1337 = vsel %vm943, %v1336, %v1335
        %v1338 = vrot.slane %v734, 1
        %v1339 = vsel %vm946, %v1338, %v1337
        %v1340 = vrot.slane %v786, 7
        %v1341 = vsel %vm928, %v1340, %v784
        %v1342 = vrot.slane %v788, 6
        %v1343 = vsel %vm931, %v1342, %v1341
        %v1344 = vrot.slane %v790, 5
        %v1345 = vsel %vm934, %v1344, %v1343
        %v1346 = vrot.slane %v792, 4
        %v1347 = vsel %vm937, %v1346, %v1345
        %v1348 = vrot.slane %v794, 3
        %v1349 = vsel %vm940, %v1348, %v1347
        %v1350 = vrot.slane %v796, 2
        %v1351 = vsel %vm943, %v1350, %v1349
        %v1352 = vrot.slane %v798, 1
        %v1353 = vsel %vm946, %v1352, %v1351
        %v1354 = vrot.slane %v850, 7
        %v1355 = vsel %vm928, %v1354, %v848
        %v1356 = vrot.slane %v852, 6
        %v1357 = vsel %vm931, %v1356, %v1355
        %v1358 = vrot.slane %v854, 5
        %v1359 = vsel %vm934, %v1358, %v1357
        %v1360 = vrot.slane %v856, 4
        %v1361 = vsel %vm937, %v1360, %v1359
        %v1362 = vrot.slane %v858, 3
        %v1363 = vsel %vm940, %v1362, %v1361
        %v1364 = vrot.slane %v860, 2
        %v1365 = vsel %vm943, %v1364, %v1363
        %v1366 = vrot.slane %v862, 1
        %v1367 = vsel %vm946, %v1366, %v1365
        %v1368 = vrot.slane %v914, 7
        %v1369 = vsel %vm928, %v1368, %v912
        %v1370 = vrot.slane %v916, 6
        %v1371 = vsel %vm931, %v1370, %v1369
        %v1372 = vrot.slane %v918, 5
        %v1373 = vsel %vm934, %v1372, %v1371
        %v1374 = vrot.slane %v920, 4
        %v1375 = vsel %vm937, %v1374, %v1373
        %v1376 = vrot.slane %v922, 3
        %v1377 = vsel %vm940, %v1376, %v1375
        %v1378 = vrot.slane %v924, 2
        %v1379 = vsel %vm943, %v1378, %v1377
        %v1380 = vrot.slane %v926, 1
        %v1381 = vsel %vm946, %v1380, %v1379
        %v1414 = vrot.slane %v975, 4
        %vm1415 = vcmask 1047556
        %v1416 = vsel %vm1415, %v1414, %v947
        %v1417 = vrot.slane %v947, 4
        %v1418 = vsel %vm1415, %v975, %v1417
        %v1420 = vunpack.c.l.s4 1983009808
        %v1421 = vunpack.c.0.s8 %v1420
        %v1422 = vperm.slane %v1416, %v1421
        %v1424 = vunpack.c.l.s4 1983009808
        %v1425 = vunpack.c.0.s8 %v1424
        %v1426 = vperm.slane %v1418, %v1425
        %v1427 = vrot.slane %v989, 4
        %v1428 = vsel %vm1415, %v1427, %v961
        %v1429 = vrot.slane %v961, 4
        %v1430 = vsel %vm1415, %v989, %v1429
        %v1432 = vunpack.c.l.s4 1983009808
        %v1433 = vunpack.c.0.s8 %v1432
        %v1434 = vperm.slane %v1428, %v1433
        %v1436 = vunpack.c.l.s4 1983009808
        %v1437 = vunpack.c.0.s8 %v1436
        %v1438 = vperm.slane %v1430, %v1437
        %v1439 = vrot.slane %v1031, 4
        %v1440 = vsel %vm1415, %v1439, %v1003
        %v1441 = vrot.slane %v1003, 4
        %v1442 = vsel %vm1415, %v1031, %v1441
        %v1444 = vunpack.c.l.s4 1983009808
        %v1445 = vunpack.c.0.s8 %v1444
        %v1446 = vperm.slane %v1440, %v1445
        %v1448 = vunpack.c.l.s4 1983009808
        %v1449 = vunpack.c.0.s8 %v1448
        %v1450 = vperm.slane %v1442, %v1449
        %v1451 = vrot.slane %v1045, 4
        %v1452 = vsel %vm1415, %v1451, %v1017
        %v1453 = vrot.slane %v1017, 4
        %v1454 = vsel %vm1415, %v1045, %v1453
        %v1456 = vunpack.c.l.s4 1983009808
        %v1457 = vunpack.c.0.s8 %v1456
        %v1458 = vperm.slane %v1452, %v1457
        %v1460 = vunpack.c.l.s4 1983009808
        %v1461 = vunpack.c.0.s8 %v1460
        %v1462 = vperm.slane %v1454, %v1461
        %v1463 = vrot.slane %v1434, 4
        %v1464 = vsel %vm1415, %v1463, %v1422
        %v1465 = vrot.slane %v1422, 4
        %v1466 = vsel %vm1415, %v1434, %v1465
        %v1468 = vunpack.c.l.s4 1934713408
        %v1469 = vunpack.c.0.s8 %v1468
        %v1470 = vperm.slane %v1464, %v1469
        %v1472 = vunpack.c.l.s4 1934713408
        %v1473 = vunpack.c.0.s8 %v1472
        %v1474 = vperm.slane %v1466, %v1473
        %v1475 = vrot.slane %v1438, 4
        %v1476 = vsel %vm1415, %v1475, %v1426
        %v1477 = vrot.slane %v1426, 4
        %v1478 = vsel %vm1415, %v1438, %v1477
        %v1480 = vunpack.c.l.s4 1934713408
        %v1481 = vunpack.c.0.s8 %v1480
        %v1482 = vperm.slane %v1476, %v1481
        %v1484 = vunpack.c.l.s4 1934713408
        %v1485 = vunpack.c.0.s8 %v1484
        %v1486 = vperm.slane %v1478, %v1485
        %v1487 = vrot.slane %v1458, 4
        %v1488 = vsel %vm1415, %v1487, %v1446
        %v1489 = vrot.slane %v1446, 4
        %v1490 = vsel %vm1415, %v1458, %v1489
        %v1492 = vunpack.c.l.s4 1934713408
        %v1493 = vunpack.c.0.s8 %v1492
        %v1494 = vperm.slane %v1488, %v1493
        %v1496 = vunpack.c.l.s4 1934713408
        %v1497 = vunpack.c.0.s8 %v1496
        %v1498 = vperm.slane %v1490, %v1497
        %v1499 = vrot.slane %v1462, 4
        %v1500 = vsel %vm1415, %v1499, %v1450
        %v1501 = vrot.slane %v1450, 4
        %v1502 = vsel %vm1415, %v1462, %v1501
        %v1504 = vunpack.c.l.s4 1934713408
        %v1505 = vunpack.c.0.s8 %v1504
        %v1506 = vperm.slane %v1500, %v1505
        %v1508 = vunpack.c.l.s4 1934713408
        %v1509 = vunpack.c.0.s8 %v1508
        %v1510 = vperm.slane %v1502, %v1509
        %v1511 = vrot.slane %v1494, 4
        %v1512 = vsel %vm1415, %v1511, %v1470
        %v1513 = vrot.slane %v1470, 4
        %v1514 = vsel %vm1415, %v1494, %v1513
        %v1515 = vrot.slane %v1498, 4
        %v1516 = vsel %vm1415, %v1515, %v1474
        %v1517 = vrot.slane %v1474, 4
        %v1518 = vsel %vm1415, %v1498, %v1517
        %v1519 = vrot.slane %v1506, 4
        %v1520 = vsel %vm1415, %v1519, %v1482
        %v1521 = vrot.slane %v1482, 4
        %v1522 = vsel %vm1415, %v1506, %v1521
        %v1523 = vrot.slane %v1510, 4
        %v1524 = vsel %vm1415, %v1523, %v1486
        %v1525 = vrot.slane %v1486, 4
        %v1526 = vsel %vm1415, %v1510, %v1525
        %v1527 = vrot.slane %v1087, 4
        %v1528 = vsel %vm1415, %v1527, %v1059
        %v1529 = vrot.slane %v1059, 4
        %v1530 = vsel %vm1415, %v1087, %v1529
        %v1532 = vunpack.c.l.s4 1983009808
        %v1533 = vunpack.c.0.s8 %v1532
        %v1534 = vperm.slane %v1528, %v1533
        %v1536 = vunpack.c.l.s4 1983009808
        %v1537 = vunpack.c.0.s8 %v1536
        %v1538 = vperm.slane %v1530, %v1537
        %v1539 = vrot.slane %v1101, 4
        %v1540 = vsel %vm1415, %v1539, %v1073
        %v1541 = vrot.slane %v1073, 4
        %v1542 = vsel %vm1415, %v1101, %v1541
        %v1544 = vunpack.c.l.s4 1983009808
        %v1545 = vunpack.c.0.s8 %v1544
        %v1546 = vperm.slane %v1540, %v1545
        %v1548 = vunpack.c.l.s4 1983009808
        %v1549 = vunpack.c.0.s8 %v1548
        %v1550 = vperm.slane %v1542, %v1549
        %v1551 = vrot.slane %v1143, 4
        %v1552 = vsel %vm1415, %v1551, %v1115
        %v1553 = vrot.slane %v1115, 4
        %v1554 = vsel %vm1415, %v1143, %v1553
        %v1556 = vunpack.c.l.s4 1983009808
        %v1557 = vunpack.c.0.s8 %v1556
        %v1558 = vperm.slane %v1552, %v1557
        %v1560 = vunpack.c.l.s4 1983009808
        %v1561 = vunpack.c.0.s8 %v1560
        %v1562 = vperm.slane %v1554, %v1561
        %v1563 = vrot.slane %v1157, 4
        %v1564 = vsel %vm1415, %v1563, %v1129
        %v1565 = vrot.slane %v1129, 4
        %v1566 = vsel %vm1415, %v1157, %v1565
        %v1568 = vunpack.c.l.s4 1983009808
        %v1569 = vunpack.c.0.s8 %v1568
        %v1570 = vperm.slane %v1564, %v1569
        %v1572 = vunpack.c.l.s4 1983009808
        %v1573 = vunpack.c.0.s8 %v1572
        %v1574 = vperm.slane %v1566, %v1573
        %v1575 = vrot.slane %v1546, 4
        %v1576 = vsel %vm1415, %v1575, %v1534
        %v1577 = vrot.slane %v1534, 4
        %v1578 = vsel %vm1415, %v1546, %v1577
        %v1580 = vunpack.c.l.s4 1934713408
        %v1581 = vunpack.c.0.s8 %v1580
        %v1582 = vperm.slane %v1576, %v1581
        %v1584 = vunpack.c.l.s4 1934713408
        %v1585 = vunpack.c.0.s8 %v1584
        %v1586 = vperm.slane %v1578, %v1585
        %v1587 = vrot.slane %v1550, 4
        %v1588 = vsel %vm1415, %v1587, %v1538
        %v1589 = vrot.slane %v1538, 4
        %v1590 = vsel %vm1415, %v1550, %v1589
        %v1592 = vunpack.c.l.s4 1934713408
        %v1593 = vunpack.c.0.s8 %v1592
        %v1594 = vperm.slane %v1588, %v1593
        %v1596 = vunpack.c.l.s4 1934713408
        %v1597 = vunpack.c.0.s8 %v1596
        %v1598 = vperm.slane %v1590, %v1597
        %v1599 = vrot.slane %v1570, 4
        %v1600 = vsel %vm1415, %v1599, %v1558
        %v1601 = vrot.slane %v1558, 4
        %v1602 = vsel %vm1415, %v1570, %v1601
        %v1604 = vunpack.c.l.s4 1934713408
        %v1605 = vunpack.c.0.s8 %v1604
        %v1606 = vperm.slane %v1600, %v1605
        %v1608 = vunpack.c.l.s4 1934713408
        %v1609 = vunpack.c.0.s8 %v1608
        %v1610 = vperm.slane %v1602, %v1609
        %v1611 = vrot.slane %v1574, 4
        %v1612 = vsel %vm1415, %v1611, %v1562
        %v1613 = vrot.slane %v1562, 4
        %v1614 = vsel %vm1415, %v1574, %v1613
        %v1616 = vunpack.c.l.s4 1934713408
        %v1617 = vunpack.c.0.s8 %v1616
        %v1618 = vperm.slane %v1612, %v1617
        %v1620 = vunpack.c.l.s4 1934713408
        %v1621 = vunpack.c.0.s8 %v1620
        %v1622 = vperm.slane %v1614, %v1621
        %v1623 = vrot.slane %v1606, 4
        %v1624 = vsel %vm1415, %v1623, %v1582
        %v1625 = vrot.slane %v1582, 4
        %v1626 = vsel %vm1415, %v1606, %v1625
        %v1627 = vrot.slane %v1610, 4
        %v1628 = vsel %vm1415, %v1627, %v1586
        %v1629 = vrot.slane %v1586, 4
        %v1630 = vsel %vm1415, %v1610, %v1629
        %v1631 = vrot.slane %v1618, 4
        %v1632 = vsel %vm1415, %v1631, %v1594
        %v1633 = vrot.slane %v1594, 4
        %v1634 = vsel %vm1415, %v1618, %v1633
        %v1635 = vrot.slane %v1622, 4
        %v1636 = vsel %vm1415, %v1635, %v1598
        %v1637 = vrot.slane %v1598, 4
        %v1638 = vsel %vm1415, %v1622, %v1637
        %v1639 = vrot.slane %v1199, 4
        %v1640 = vsel %vm1415, %v1639, %v1171
        %v1641 = vrot.slane %v1171, 4
        %v1642 = vsel %vm1415, %v1199, %v1641
        %v1644 = vunpack.c.l.s4 1983009808
        %v1645 = vunpack.c.0.s8 %v1644
        %v1646 = vperm.slane %v1640, %v1645
        %v1648 = vunpack.c.l.s4 1983009808
        %v1649 = vunpack.c.0.s8 %v1648
        %v1650 = vperm.slane %v1642, %v1649
        %v1651 = vrot.slane %v1213, 4
        %v1652 = vsel %vm1415, %v1651, %v1185
        %v1653 = vrot.slane %v1185, 4
        %v1654 = vsel %vm1415, %v1213, %v1653
        %v1656 = vunpack.c.l.s4 1983009808
        %v1657 = vunpack.c.0.s8 %v1656
        %v1658 = vperm.slane %v1652, %v1657
        %v1660 = vunpack.c.l.s4 1983009808
        %v1661 = vunpack.c.0.s8 %v1660
        %v1662 = vperm.slane %v1654, %v1661
        %v1663 = vrot.slane %v1255, 4
        %v1664 = vsel %vm1415, %v1663, %v1227
        %v1665 = vrot.slane %v1227, 4
        %v1666 = vsel %vm1415, %v1255, %v1665
        %v1668 = vunpack.c.l.s4 1983009808
        %v1669 = vunpack.c.0.s8 %v1668
        %v1670 = vperm.slane %v1664, %v1669
        %v1672 = vunpack.c.l.s4 1983009808
        %v1673 = vunpack.c.0.s8 %v1672
        %v1674 = vperm.slane %v1666, %v1673
        %v1675 = vrot.slane %v1269, 4
        %v1676 = vsel %vm1415, %v1675, %v1241
        %v1677 = vrot.slane %v1241, 4
        %v1678 = vsel %vm1415, %v1269, %v1677
        %v1680 = vunpack.c.l.s4 1983009808
        %v1681 = vunpack.c.0.s8 %v1680
        %v1682 = vperm.slane %v1676, %v1681
        %v1684 = vunpack.c.l.s4 1983009808
        %v1685 = vunpack.c.0.s8 %v1684
        %v1686 = vperm.slane %v1678, %v1685
        %v1687 = vrot.slane %v1658, 4
        %v1688 = vsel %vm1415, %v1687, %v1646
        %v1689 = vrot.slane %v1646, 4
        %v1690 = vsel %vm1415, %v1658, %v1689
        %v1692 = vunpack.c.l.s4 1934713408
        %v1693 = vunpack.c.0.s8 %v1692
        %v1694 = vperm.slane %v1688, %v1693
        %v1696 = vunpack.c.l.s4 1934713408
        %v1697 = vunpack.c.0.s8 %v1696
        %v1698 = vperm.slane %v1690, %v1697
        %v1699 = vrot.slane %v1662, 4
        %v1700 = vsel %vm1415, %v1699, %v1650
        %v1701 = vrot.slane %v1650, 4
        %v1702 = vsel %vm1415, %v1662, %v1701
        %v1704 = vunpack.c.l.s4 1934713408
        %v1705 = vunpack.c.0.s8 %v1704
        %v1706 = vperm.slane %v1700, %v1705
        %v1708 = vunpack.c.l.s4 1934713408
        %v1709 = vunpack.c.0.s8 %v1708
        %v1710 = vperm.slane %v1702, %v1709
        %v1711 = vrot.slane %v1682, 4
        %v1712 = vsel %vm1415, %v1711, %v1670
        %v1713 = vrot.slane %v1670, 4
        %v1714 = vsel %vm1415, %v1682, %v1713
        %v1716 = vunpack.c.l.s4 1934713408
        %v1717 = vunpack.c.0.s8 %v1716
        %v1718 = vperm.slane %v1712, %v1717
        %v1720 = vunpack.c.l.s4 1934713408
        %v1721 = vunpack.c.0.s8 %v1720
        %v1722 = vperm.slane %v1714, %v1721
        %v1723 = vrot.slane %v1686, 4
        %v1724 = vsel %vm1415, %v1723, %v1674
        %v1725 = vrot.slane %v1674, 4
        %v1726 = vsel %vm1415, %v1686, %v1725
        %v1728 = vunpack.c.l.s4 1934713408
        %v1729 = vunpack.c.0.s8 %v1728
        %v1730 = vperm.slane %v1724, %v1729
        %v1732 = vunpack.c.l.s4 1934713408
        %v1733 = vunpack.c.0.s8 %v1732
        %v1734 = vperm.slane %v1726, %v1733
        %v1735 = vrot.slane %v1718, 4
        %v1736 = vsel %vm1415, %v1735, %v1694
        %v1737 = vrot.slane %v1694, 4
        %v1738 = vsel %vm1415, %v1718, %v1737
        %v1739 = vrot.slane %v1722, 4
        %v1740 = vsel %vm1415, %v1739, %v1698
        %v1741 = vrot.slane %v1698, 4
        %v1742 = vsel %vm1415, %v1722, %v1741
        %v1743 = vrot.slane %v1730, 4
        %v1744 = vsel %vm1415, %v1743, %v1706
        %v1745 = vrot.slane %v1706, 4
        %v1746 = vsel %vm1415, %v1730, %v1745
        %v1747 = vrot.slane %v1734, 4
        %v1748 = vsel %vm1415, %v1747, %v1710
        %v1749 = vrot.slane %v1710, 4
        %v1750 = vsel %vm1415, %v1734, %v1749
        %v1751 = vrot.slane %v1311, 4
        %v1752 = vsel %vm1415, %v1751, %v1283
        %v1753 = vrot.slane %v1283, 4
        %v1754 = vsel %vm1415, %v1311, %v1753
        %v1756 = vunpack.c.l.s4 1983009808
        %v1757 = vunpack.c.0.s8 %v1756
        %v1758 = vperm.slane %v1752, %v1757
        %v1760 = vunpack.c.l.s4 1983009808
        %v1761 = vunpack.c.0.s8 %v1760
        %v1762 = vperm.slane %v1754, %v1761
        %v1763 = vrot.slane %v1325, 4
        %v1764 = vsel %vm1415, %v1763, %v1297
        %v1765 = vrot.slane %v1297, 4
        %v1766 = vsel %vm1415, %v1325, %v1765
        %v1768 = vunpack.c.l.s4 1983009808
        %v1769 = vunpack.c.0.s8 %v1768
        %v1770 = vperm.slane %v1764, %v1769
        %v1772 = vunpack.c.l.s4 1983009808
        %v1773 = vunpack.c.0.s8 %v1772
        %v1774 = vperm.slane %v1766, %v1773
        %v1775 = vrot.slane %v1367, 4
        %v1776 = vsel %vm1415, %v1775, %v1339
        %v1777 = vrot.slane %v1339, 4
        %v1778 = vsel %vm1415, %v1367, %v1777
        %v1780 = vunpack.c.l.s4 1983009808
        %v1781 = vunpack.c.0.s8 %v1780
        %v1782 = vperm.slane %v1776, %v1781
        %v1784 = vunpack.c.l.s4 1983009808
        %v1785 = vunpack.c.0.s8 %v1784
        %v1786 = vperm.slane %v1778, %v1785
        %v1787 = vrot.slane %v1381, 4
        %v1788 = vsel %vm1415, %v1787, %v1353
        %v1789 = vrot.slane %v1353, 4
        %v1790 = vsel %vm1415, %v1381, %v1789
        %v1792 = vunpack.c.l.s4 1983009808
        %v1793 = vunpack.c.0.s8 %v1792
        %v1794 = vperm.slane %v1788, %v1793
        %v1796 = vunpack.c.l.s4 1983009808
        %v1797 = vunpack.c.0.s8 %v1796
        %v1798 = vperm.slane %v1790, %v1797
        %v1799 = vrot.slane %v1770, 4
        %v1800 = vsel %vm1415, %v1799, %v1758
        %v1801 = vrot.slane %v1758, 4
        %v1802 = vsel %vm1415, %v1770, %v1801
        %v1804 = vunpack.c.l.s4 1934713408
        %v1805 = vunpack.c.0.s8 %v1804
        %v1806 = vperm.slane %v1800, %v1805
        %v1808 = vunpack.c.l.s4 1934713408
        %v1809 = vunpack.c.0.s8 %v1808
        %v1810 = vperm.slane %v1802, %v1809
        %v1811 = vrot.slane %v1774, 4
        %v1812 = vsel %vm1415, %v1811, %v1762
        %v1813 = vrot.slane %v1762, 4
        %v1814 = vsel %vm1415, %v1774, %v1813
        %v1816 = vunpack.c.l.s4 1934713408
        %v1817 = vunpack.c.0.s8 %v1816
        %v1818 = vperm.slane %v1812, %v1817
        %v1820 = vunpack.c.l.s4 1934713408
        %v1821 = vunpack.c.0.s8 %v1820
        %v1822 = vperm.slane %v1814, %v1821
        %v1823 = vrot.slane %v1794, 4
        %v1824 = vsel %vm1415, %v1823, %v1782
        %v1825 = vrot.slane %v1782, 4
        %v1826 = vsel %vm1415, %v1794, %v1825
        %v1828 = vunpack.c.l.s4 1934713408
        %v1829 = vunpack.c.0.s8 %v1828
        %v1830 = vperm.slane %v1824, %v1829
        %v1832 = vunpack.c.l.s4 1934713408
        %v1833 = vunpack.c.0.s8 %v1832
        %v1834 = vperm.slane %v1826, %v1833
        %v1835 = vrot.slane %v1798, 4
        %v1836 = vsel %vm1415, %v1835, %v1786
        %v1837 = vrot.slane %v1786, 4
        %v1838 = vsel %vm1415, %v1798, %v1837
        %v1840 = vunpack.c.l.s4 1934713408
        %v1841 = vunpack.c.0.s8 %v1840
        %v1842 = vperm.slane %v1836, %v1841
        %v1844 = vunpack.c.l.s4 1934713408
        %v1845 = vunpack.c.0.s8 %v1844
        %v1846 = vperm.slane %v1838, %v1845
        %v1847 = vrot.slane %v1830, 4
        %v1848 = vsel %vm1415, %v1847, %v1806
        %v1849 = vrot.slane %v1806, 4
        %v1850 = vsel %vm1415, %v1830, %v1849
        %v1851 = vrot.slane %v1834, 4
        %v1852 = vsel %vm1415, %v1851, %v1810
        %v1853 = vrot.slane %v1810, 4
        %v1854 = vsel %vm1415, %v1834, %v1853
        %v1855 = vrot.slane %v1842, 4
        %v1856 = vsel %vm1415, %v1855, %v1818
        %v1857 = vrot.slane %v1818, 4
        %v1858 = vsel %vm1415, %v1842, %v1857
        %v1859 = vrot.slane %v1846, 4
        %v1860 = vsel %vm1415, %v1859, %v1822
        %v1861 = vrot.slane %v1822, 4
        %v1862 = vsel %vm1415, %v1846, %v1861
        %vm1863 = vcmask 15360
        %v1864 = vsel %vm1863, %v1512, 0.0
        %1865 = vadd.xlane.f32.xlu0 %v1864
        %v1866 = vpop.xlane.xlu0 %1865
        %v1867 = vsel %vm1863, %v1514, 0.0
        %1868 = vadd.xlane.f32.xlu0 %v1867
        %v1869 = vpop.xlane.xlu0 %1868
        %v1870 = vsel %vm1863, %v1516, 0.0
        %1871 = vadd.xlane.f32.xlu0 %v1870
        %v1872 = vpop.xlane.xlu0 %1871
        %v1873 = vsel %vm1863, %v1518, 0.0
        %1874 = vadd.xlane.f32.xlu0 %v1873
        %v1875 = vpop.xlane.xlu0 %1874
        %v1876 = vsel %vm1863, %v1520, 0.0
        %1877 = vadd.xlane.f32.xlu0 %v1876
        %v1878 = vpop.xlane.xlu0 %1877
        %v1879 = vsel %vm1863, %v1522, 0.0
        %1880 = vadd.xlane.f32.xlu0 %v1879
        %v1881 = vpop.xlane.xlu0 %1880
        %v1882 = vsel %vm1863, %v1524, 0.0
        %1883 = vadd.xlane.f32.xlu0 %v1882
        %v1884 = vpop.xlane.xlu0 %1883
        %v1885 = vsel %vm1863, %v1526, 0.0
        %1886 = vadd.xlane.f32.xlu0 %v1885
        %v1887 = vpop.xlane.xlu0 %1886
        %v1888 = vsel %vm1863, %v1624, 0.0
        %1889 = vadd.xlane.f32.xlu0 %v1888
        %v1890 = vpop.xlane.xlu0 %1889
        %v1891 = vsel %vm1863, %v1626, 0.0
        %1892 = vadd.xlane.f32.xlu0 %v1891
        %v1893 = vpop.xlane.xlu0 %1892
        %v1894 = vsel %vm1863, %v1628, 0.0
        %1895 = vadd.xlane.f32.xlu0 %v1894
        %v1896 = vpop.xlane.xlu0 %1895
        %v1897 = vsel %vm1863, %v1630, 0.0
        %1898 = vadd.xlane.f32.xlu0 %v1897
        %v1899 = vpop.xlane.xlu0 %1898
        %v1900 = vsel %vm1863, %v1632, 0.0
        %1901 = vadd.xlane.f32.xlu0 %v1900
        %v1902 = vpop.xlane.xlu0 %1901
        %v1903 = vsel %vm1863, %v1634, 0.0
        %1904 = vadd.xlane.f32.xlu0 %v1903
        %v1905 = vpop.xlane.xlu0 %1904
        %v1906 = vsel %vm1863, %v1636, 0.0
        %1907 = vadd.xlane.f32.xlu0 %v1906
        %v1908 = vpop.xlane.xlu0 %1907
        %v1909 = vsel %vm1863, %v1638, 0.0
        %1910 = vadd.xlane.f32.xlu0 %v1909
        %v1911 = vpop.xlane.xlu0 %1910
        %v1912 = vsel %vm1863, %v1736, 0.0
        %1913 = vadd.xlane.f32.xlu0 %v1912
        %v1914 = vpop.xlane.xlu0 %1913
        %v1915 = vsel %vm1863, %v1738, 0.0
        %1916 = vadd.xlane.f32.xlu0 %v1915
        %v1917 = vpop.xlane.xlu0 %1916
        %v1918 = vsel %vm1863, %v1740, 0.0
        %1919 = vadd.xlane.f32.xlu0 %v1918
        %v1920 = vpop.xlane.xlu0 %1919
        %v1921 = vsel %vm1863, %v1742, 0.0
        %1922 = vadd.xlane.f32.xlu0 %v1921
        %v1923 = vpop.xlane.xlu0 %1922
        %v1924 = vsel %vm1863, %v1744, 0.0
        %1925 = vadd.xlane.f32.xlu0 %v1924
        %v1926 = vpop.xlane.xlu0 %1925
        %v1927 = vsel %vm1863, %v1746, 0.0
        %1928 = vadd.xlane.f32.xlu0 %v1927
        %v1929 = vpop.xlane.xlu0 %1928
        %v1930 = vsel %vm1863, %v1748, 0.0
        %1931 = vadd.xlane.f32.xlu0 %v1930
        %v1932 = vpop.xlane.xlu0 %1931
        %v1933 = vsel %vm1863, %v1750, 0.0
        %1934 = vadd.xlane.f32.xlu0 %v1933
        %v1935 = vpop.xlane.xlu0 %1934
        %v1936 = vsel %vm1863, %v1848, 0.0
        %1937 = vadd.xlane.f32.xlu0 %v1936
        %v1938 = vpop.xlane.xlu0 %1937
        %v1939 = vsel %vm1863, %v1850, 0.0
        %1940 = vadd.xlane.f32.xlu0 %v1939
        %v1941 = vpop.xlane.xlu0 %1940
        %v1942 = vsel %vm1863, %v1852, 0.0
        %1943 = vadd.xlane.f32.xlu0 %v1942
        %v1944 = vpop.xlane.xlu0 %1943
        %v1945 = vsel %vm1863, %v1854, 0.0
        %1946 = vadd.xlane.f32.xlu0 %v1945
        %v1947 = vpop.xlane.xlu0 %1946
        %v1948 = vsel %vm1863, %v1856, 0.0
        %1949 = vadd.xlane.f32.xlu0 %v1948
        %v1950 = vpop.xlane.xlu0 %1949
        %v1951 = vsel %vm1863, %v1858, 0.0
        %1952 = vadd.xlane.f32.xlu0 %v1951
        %v1953 = vpop.xlane.xlu0 %1952
        %v1954 = vsel %vm1863, %v1860, 0.0
        %1955 = vadd.xlane.f32.xlu0 %v1954
        %v1956 = vpop.xlane.xlu0 %1955
        %v1957 = vsel %vm1863, %v1862, 0.0
        %1958 = vadd.xlane.f32.xlu0 %v1957
        %v1959 = vpop.xlane.xlu0 %1958
        %v1960 = vmul.f32 %v1866, 0.25
        %v1961 = vmul.f32 %v1869, 0.25
        %v1962 = vmul.f32 %v1872, 0.25
        %v1963 = vmul.f32 %v1875, 0.25
        %v1964 = vmul.f32 %v1878, 0.25
        %v1965 = vmul.f32 %v1881, 0.25
        %v1966 = vmul.f32 %v1884, 0.25
        %v1967 = vmul.f32 %v1887, 0.25
        %v1968 = vmul.f32 %v1890, 0.25
        %v1969 = vmul.f32 %v1893, 0.25
        %v1970 = vmul.f32 %v1896, 0.25
        %v1971 = vmul.f32 %v1899, 0.25
        %v1972 = vmul.f32 %v1902, 0.25
        %v1973 = vmul.f32 %v1905, 0.25
        %v1974 = vmul.f32 %v1908, 0.25
        %v1975 = vmul.f32 %v1911, 0.25
        %v1976 = vmul.f32 %v1914, 0.25
        %v1977 = vmul.f32 %v1917, 0.25
        %v1978 = vmul.f32 %v1920, 0.25
        %v1979 = vmul.f32 %v1923, 0.25
        %v1980 = vmul.f32 %v1926, 0.25
        %v1981 = vmul.f32 %v1929, 0.25
        %v1982 = vmul.f32 %v1932, 0.25
        %v1983 = vmul.f32 %v1935, 0.25
        %v1984 = vmul.f32 %v1938, 0.25
        %v1985 = vmul.f32 %v1941, 0.25
        %v1986 = vmul.f32 %v1944, 0.25
        %v1987 = vmul.f32 %v1947, 0.25
        %v1988 = vmul.f32 %v1950, 0.25
        %v1989 = vmul.f32 %v1953, 0.25
        %v1990 = vmul.f32 %v1956, 0.25
        %v1991 = vmul.f32 %v1959, 0.25
        %v2024 = vlaneseq
        %v2025 = vand.u32 %v2024, 127
        %v2026 = vperm.slane %v1960, %v2025
        %v2027 = vperm.slane %v1961, %v2025
        %v2028 = vperm.slane %v1962, %v2025
        %v2029 = vperm.slane %v1963, %v2025
        %v2030 = vperm.slane %v1964, %v2025
        %v2031 = vperm.slane %v1965, %v2025
        %v2032 = vperm.slane %v1966, %v2025
        %v2033 = vperm.slane %v1967, %v2025
        %v2034 = vperm.slane %v1968, %v2025
        %v2035 = vperm.slane %v1969, %v2025
        %v2036 = vperm.slane %v1970, %v2025
        %v2037 = vperm.slane %v1971, %v2025
        %v2038 = vperm.slane %v1972, %v2025
        %v2039 = vperm.slane %v1973, %v2025
        %v2040 = vperm.slane %v1974, %v2025
        %v2041 = vperm.slane %v1975, %v2025
        %v2042 = vperm.slane %v1976, %v2025
        %v2043 = vperm.slane %v1977, %v2025
        %v2044 = vperm.slane %v1978, %v2025
        %v2045 = vperm.slane %v1979, %v2025
        %v2046 = vperm.slane %v1980, %v2025
        %v2047 = vperm.slane %v1981, %v2025
        %v2048 = vperm.slane %v1982, %v2025
        %v2049 = vperm.slane %v1983, %v2025
        %v2050 = vperm.slane %v1984, %v2025
        %v2051 = vperm.slane %v1985, %v2025
        %v2052 = vperm.slane %v1986, %v2025
        %v2053 = vperm.slane %v1987, %v2025
        %v2054 = vperm.slane %v1988, %v2025
        %v2055 = vperm.slane %v1989, %v2025
        %v2056 = vperm.slane %v1990, %v2025
        %v2057 = vperm.slane %v1991, %v2025
        %v2058 = vsel %vm928, %v2027, %v2026
        %v2059 = vsel %vm931, %v2028, %v2058
        %v2060 = vsel %vm934, %v2029, %v2059
        %v2061 = vsel %vm937, %v2030, %v2060
        %v2062 = vsel %vm940, %v2031, %v2061
        %v2063 = vsel %vm943, %v2032, %v2062
        %v2064 = vsel %vm946, %v2033, %v2063
        %v2065 = vsel %vm928, %v2035, %v2034
        %v2066 = vsel %vm931, %v2036, %v2065
        %v2067 = vsel %vm934, %v2037, %v2066
        %v2068 = vsel %vm937, %v2038, %v2067
        %v2069 = vsel %vm940, %v2039, %v2068
        %v2070 = vsel %vm943, %v2040, %v2069
        %v2071 = vsel %vm946, %v2041, %v2070
        %v2072 = vsel %vm928, %v2043, %v2042
        %v2073 = vsel %vm931, %v2044, %v2072
        %v2074 = vsel %vm934, %v2045, %v2073
        %v2075 = vsel %vm937, %v2046, %v2074
        %v2076 = vsel %vm940, %v2047, %v2075
        %v2077 = vsel %vm943, %v2048, %v2076
        %v2078 = vsel %vm946, %v2049, %v2077
        %v2079 = vsel %vm928, %v2051, %v2050
        %v2080 = vsel %vm931, %v2052, %v2079
        %v2081 = vsel %vm934, %v2053, %v2080
        %v2082 = vsel %vm937, %v2054, %v2081
        %v2083 = vsel %vm940, %v2055, %v2082
        %v2084 = vsel %vm943, %v2056, %v2083
        %v2085 = vsel %vm946, %v2057, %v2084
        %vm2090 = vcmask 64512
        %2091 = vst.msk [vmem:[%s155] sm:$0xff] %vm2090, %v2064
        %2092 = vst.msk [vmem:[%s155 + $0x8] sm:$0xff] %vm2090, %v2071
        %2093 = vst.msk [vmem:[%s155 + $0x10] sm:$0xff] %vm2090, %v2078
        %2094 = vst.msk [vmem:[%s155 + $0x18] sm:$0xff] %vm2090, %v2085
        %s2095 = sand.u32 %s68, 1
        %s2096 = scalar_lea.sflag [#allocation4], %s2095
        %s2097 = sand.u32 %s68, 1
        %s2098 = smul.addr %s2097, 32
        %s2099 = scalar_lea.vmem [#allocation5], %s2098
        // Predicated region
        $region29: #{tpu_custom_call.1} parent=23 // pred_check
          %p2100 = pneg %p78
        $region30: #{tpu_custom_call.1} parent=23 // pred_check_branch
          %2102 = sbr.rel (%p2100) target = $region32
        $region31: #{tpu_custom_call.1} parent=23 // pred_region
          %s2103 = smul.u32 4, %s23
          %2105 = vsyncadd %s2096, 0
          %s2106 = smul.addr %s22, 4
          %s2107 = sadd.s32 %s2103, %s2106
          %s2108 = smul.addr %s2107, 8
          %s2109 = scalar_lea.hbm %s1, %s2108
          %s2110 = sshll.u32 %s2099, 4
          %s2111 = int_to_ptr.vmem [resolvable:$true] %s2110
          %s2112 = sshll.u32 %s2109, 4
          %s2113 = int_to_ptr.hbm [resolvable:$true] %s2112
          %2118 = dma.vmem_to_hbm [thread:$0]  %s2111, 512, %s2113, %s2096, 128, 128, 8
        $region32: #{tpu_custom_call.1} parent=23 // pred_fallthru
          _
      $region24: #{tpu_custom_call.1} parent=5 // pred_fallthru
        _
      %p2119 = scmp.le.s32.totalorder 2, %s13
      // Predicated region
      $region33: #{tpu_custom_call.1} parent=5 // pred_check
        %p2120 = pneg %p2119
      $region34: #{tpu_custom_call.1} parent=5 // pred_check_branch
        %2122 = sbr.rel (%p2120) target = $region36
      $region35: #{tpu_custom_call.1} parent=5 // pred_region
        %s2123 = ssub.s32 %s13, 2
        // Predicated region
        $region37: #{tpu_custom_call.1} parent=35 // pred_check
          %p2124 = pneg %p84
        $region38: #{tpu_custom_call.1} parent=35 // pred_check_branch
          %2126 = sbr.rel (%p2124) target = $region40
        $region39: #{tpu_custom_call.1} parent=35 // pred_region
          %s2127 = sand.u32 %s69, 1
          %s2128 = scalar_lea.sflag [#allocation4], %s2127
          %s2129 = sand.u32 %s69, 1
          %s2130 = smul.addr %s2129, 32
          %s2131 = scalar_lea.vmem [#allocation5], %s2130
          %2133 = dma.done %s2128, 512
        $region40: #{tpu_custom_call.1} parent=35 // pred_fallthru
          _
      $region36: #{tpu_custom_call.1} parent=5 // pred_fallthru
        _
    $region6: #{tpu_custom_call.1} parent=1 // loop_footer
      %s17 = sadd.s32 1, %s13
    $region7: #{tpu_custom_call.1} parent=1 // loop_footer_branch
      %12 = sbr.rel target = $region3
    $region8: #{tpu_custom_call.1} parent=1 // loop_exit
      _
    %2134 = vsyncpa [#allocation3], 1
    %s2135 = scalar_lea.sflag [#allocation3], 1
    %2136 = vsyncpa %s2135, 1
    %2137 = vsyncpa [#allocation4], 1
    %s2138 = scalar_lea.sflag [#allocation4], 1
    %2139 = vsyncpa %s2138, 1

</llo_original>
